<compile_context>
chip_gen: v6e
topology: v6e:2x2x1
jax: 0.10.0
libtpu: 0.0.40
codegen_flags: <defaults>
</compile_context>

<pallas_src>
from functools import partial

import jax
import jax.numpy as jnp
from jax import lax
from jax.experimental import pallas as pl
from jax.experimental.pallas import tpu as pltpu

# Matmul operand dtype.  float32 matches PyTorch numerics exactly; bfloat16 gives v6e/v7x
# MXU peak (f32 accumulation kept; InstanceNorm renormalizes so the error stays small).
MATMUL_DTYPE = jnp.float32


def _zero_border(pad_ref):
    """Zero the 1-pixel spatial border of a (Hp, Wp, C) VMEM scratch."""
    Hp, Wp, C = pad_ref.shape
    row = jnp.zeros((1, Wp, C), pad_ref.dtype)
    col = jnp.zeros((Hp, 1, C), pad_ref.dtype)
    pad_ref[pl.ds(0, 1), :, :] = row
    pad_ref[pl.ds(Hp - 1, 1), :, :] = row
    pad_ref[:, pl.ds(0, 1), :] = col
    pad_ref[:, pl.ds(Wp - 1, 1), :] = col


# ---------------- fused (Conv3x3 -> InstanceNorm -> LeakyReLU) x 2 kernel ----------------

def _double_conv_kernel(x_ref, w1_ref, w2_ref, o_ref,
                        xpad1_ref, xpad2_ref, col1_ref, col2_ref,
                        *, negative_slope, eps):
    # x_ref:     (1, Ho, Wo, Ci)  pooled NHWC activation for one image
    # w1_ref:    (9*Ci, Cp)       conv1 weights, tap-major K, lane-padded out channels
    # w2_ref:    (9*Cp, Cp)       conv2 weights (padded in-channel rows are zero)
    # o_ref:     (1, Ho*Wo, Cp)   lane-dense output
    # xpad*_ref: (Ho+2, Wo+2, *)  zero-bordered conv inputs (VMEM)
    # col*_ref:  (Ho*Wo, 9*C)     im2col matrices (VMEM)
    _, Ho, Wo, Ci = x_ref.shape
    Cp = o_ref.shape[-1]
    HW = Ho * Wo

    def conv_in_lrelu(pad_ref, col_ref, w_ref, c):
        # im2col once: 9 shifted-window copies, then a single MXU matmul (f32 acc).
        for dh in range(3):
            for dw in range(3):
                t = 3 * dh + dw
                win = pad_ref[pl.ds(dh, Ho), pl.ds(dw, Wo), :]
                col_ref[:, pl.ds(t * c, c)] = win.reshape(HW, c)
        y = jnp.dot(col_ref[...], w_ref[...], preferred_element_type=jnp.float32)
        # InstanceNorm2d (affine=False): per-channel stats over spatial dim, one pass.
        mean = jnp.mean(y, axis=0, keepdims=True)
        var = jnp.mean(y * y, axis=0, keepdims=True) - mean * mean
        var = jnp.maximum(var, 0.0)                    # guard E[y^2]-mean^2 cancellation
        y = (y - mean) * lax.rsqrt(var + eps)
        return jnp.maximum(y, negative_slope * y)      # LeakyReLU(0.2)

    # Border-only zeroing, every step (see header comment re: "parallel" axis & megacore).
    _zero_border(xpad1_ref)
    _zero_border(xpad2_ref)

    # --- stage 1: conv(Ci -> Cp) + IN + LeakyReLU ---
    xpad1_ref[pl.ds(1, Ho), pl.ds(1, Wo), :] = x_ref[0].astype(xpad1_ref.dtype)
    y1 = conv_in_lrelu(xpad1_ref, col1_ref, w1_ref, Ci)            # (HW, Cp) f32

    # --- stage 2: conv(Cp -> Cp) + IN + LeakyReLU; intermediate stays in VMEM ---
    # Invariant: lane-padded channels of y1 are exactly zero (zero weight columns ->
    # zero raw conv output -> zero after IN/LeakyReLU), and the padded K rows of w2
    # are zero, so the padding never leaks into real channels.
    xpad2_ref[pl.ds(1, Ho), pl.ds(1, Wo), :] = (
        y1.reshape(Ho, Wo, Cp).astype(xpad2_ref.dtype))
    y2 = conv_in_lrelu(xpad2_ref, col2_ref, w2_ref, Cp)
    o_ref[0] = y2.astype(o_ref.dtype)


def double_conv_fused(x_nhwc, w1_oihw, w2_oihw, negative_slope=0.2, eps=1e-5):
    """Fused (3x3 conv + InstanceNorm2d + LeakyReLU) x 2 on a pooled NHWC activation.

    Returns (N, Ho, Wo, Cp) with Cp = out_ch rounded up to a multiple of 128; the
    padded output channels are exactly zero.
    """
    N, Ho, Wo, Ci = x_nhwc.shape
    C1o, C1i, k1h, k1w = w1_oihw.shape
    C2o, C2i, k2h, k2w = w2_oihw.shape
    assert (k1h, k1w) == (3, 3) and (k2h, k2w) == (3, 3)
    assert C1i == Ci and C2i == C1o
    Cp = pl.cdiv(max(C1o, C2o), 128) * 128
    HW = Ho * Wo
    K1, K2 = 9 * Ci, 9 * Cp

    # (Cout, Cin, 3, 3) -> (9*Cin, Cp): tap-major K (matches im2col column order),
    # lane-padded (zero) out channels.
    w1_mat = jnp.transpose(w1_oihw, (2, 3, 1, 0)).reshape(K1, C1o)
    w1_mat = jnp.pad(w1_mat, ((0, 0), (0, Cp - C1o))).astype(MATMUL_DTYPE)
    # conv2 consumes the lane-padded Cp channels -> padded in-channel rows are zero.
    w2_mat = jnp.transpose(w2_oihw, (2, 3, 1, 0))                  # (3, 3, C2i, C2o)
    w2_mat = jnp.pad(w2_mat, ((0, 0), (0, 0), (0, Cp - C2i), (0, Cp - C2o)))
    w2_mat = w2_mat.reshape(K2, Cp).astype(MATMUL_DTYPE)

    kernel = partial(_double_conv_kernel, negative_slope=negative_slope, eps=eps)
    out = pl.pallas_call(
        kernel,
        out_shape=jax.ShapeDtypeStruct((N, HW, Cp), x_nhwc.dtype),
        grid=(N,),
        in_specs=[
            pl.BlockSpec((1, Ho, Wo, Ci), lambda n: (n, 0, 0, 0)),
            # Constant index_map -> weights DMA'd once, VMEM-resident across the grid.
            # TODO(synk): pipeline_mode=pl.Buffered(1) to drop the unused second buffer.
            pl.BlockSpec((K1, Cp), lambda n: (0, 0)),
            pl.BlockSpec((K2, Cp), lambda n: (0, 0)),
        ],
        out_specs=pl.BlockSpec((1, HW, Cp), lambda n: (n, 0, 0)),
        scratch_shapes=[
            pltpu.VMEM((Ho + 2, Wo + 2, Ci), MATMUL_DTYPE),   # padded conv1 input
            pltpu.VMEM((Ho + 2, Wo + 2, Cp), MATMUL_DTYPE),   # padded conv1 output
            pltpu.VMEM((HW, K1), MATMUL_DTYPE),               # im2col for conv1
            pltpu.VMEM((HW, K2), MATMUL_DTYPE),               # im2col for conv2
        ],
        compiler_params=pltpu.CompilerParams(
            dimension_semantics=("parallel",),
            vmem_limit_bytes=48 * 1024 * 1024,
        ),
    )(x_nhwc, w1_mat, w2_mat)
    return out.reshape(N, Ho, Wo, Cp)


# ------------------------------------ down module -------------------------------------

def maxpool2x2_nhwc(x_nhwc):
    # Plain-JAX glue.  # TODO(synk): fuse the 2x2 pool into the first conv stage.
    return lax.reduce_window(x_nhwc, -jnp.inf, lax.max,
                             (1, 2, 2, 1), (1, 2, 2, 1), "VALID")


def init_params(key, in_ch, out_ch):
    k1, k2, k3, k4 = jax.random.split(key, 4)
    w1 = jax.random.normal(k1, (out_ch, in_ch, 3, 3), jnp.float32) / jnp.sqrt(9.0 * in_ch)
    b1 = 0.01 * jax.random.normal(k2, (out_ch,), jnp.float32)
    w2 = jax.random.normal(k3, (out_ch, out_ch, 3, 3), jnp.float32) / jnp.sqrt(9.0 * out_ch)
    b2 = 0.01 * jax.random.normal(k4, (out_ch,), jnp.float32)
    return dict(w1=w1, b1=b1, w2=w2, b2=b2)


def down_forward(x_nchw, params):
    out_ch = params["w2"].shape[0]
    x = jnp.transpose(x_nchw, (0, 2, 3, 1))                 # NCHW -> NHWC
    x = maxpool2x2_nhwc(x)                                  # (N, Ho, Wo, Cin)
    y = double_conv_fused(x, params["w1"], params["w2"])    # (N, Ho, Wo, Cp)
    y = y[..., :out_ch]                                     # drop lane padding once
    return jnp.transpose(y, (0, 3, 1, 2))                   # NHWC -> NCHW


# --------------------------------- pure-JAX reference ----------------------------------

def _ref_down(x, params, eps=1e-5, slope=0.2):
    def conv_block(x, w, b):
        y = lax.conv_general_dilated(x, w, (1, 1), ((1, 1), (1, 1)),
                                     dimension_numbers=("NCHW", "OIHW", "NCHW"))
        y = y + b[None, :, None, None]          # bias kept here (no-op under IN)
        mean = jnp.mean(y, axis=(2, 3), keepdims=True)
        var = jnp.mean((y - mean) ** 2, axis=(2, 3), keepdims=True)
        y = (y - mean) * lax.rsqrt(var + eps)
        return jnp.where(y >= 0, y, slope * y)

    x = lax.reduce_window(x, -jnp.inf, lax.max, (1, 1, 2, 2), (1, 1, 2, 2), "VALID")
    x = conv_block(x, params["w1"], params["b1"])
    x = conv_block(x, params["w2"], params["b2"])
    return x


if __name__ == "__main__":
    key = jax.random.PRNGKey(0)
    kx, kp = jax.random.split(key)
    N, in_ch, out_ch, H, W = 2, 4, 8, 16, 16
    x = jax.random.normal(kx, (N, in_ch, H, W), jnp.float32)
    params = init_params(kp, in_ch, out_ch)

    y = jax.jit(down_forward)(x, params)
    jax.block_until_ready(y)

    assert y.shape == (N, out_ch, H // 2, W // 2), y.shape
    y_ref = _ref_down(x, params)
    max_err = float(jnp.max(jnp.abs(y - y_ref)))
    assert max_err < 1e-2, f"max abs error vs reference too large: {max_err}"
    print("KERNEL_OK")
</pallas_src>

<mosaic_0001>
module attributes {stable_mosaic.version = 11 : i64} {
  func.func @_double_conv_kernel(%arg0: i32, %arg1: memref<1x8x8x4xf32, #tpu.memory_space<vmem>>, %arg2: memref<36x128xf32, #tpu.memory_space<vmem>>, %arg3: memref<1152x128xf32, #tpu.memory_space<vmem>>, %arg4: memref<1x64x128xf32, #tpu.memory_space<vmem>>, %arg5: memref<10x10x4xf32, #tpu.memory_space<vmem>>, %arg6: memref<10x10x128xf32, #tpu.memory_space<vmem>>, %arg7: memref<64x36xf32, #tpu.memory_space<vmem>>, %arg8: memref<64x1152xf32, #tpu.memory_space<vmem>>) attributes {dimension_semantics = [#tpu.dimension_semantics<parallel>], iteration_bounds = array<i64: 2>, scalar_prefetch = 0 : i64, scratch_operands = 4 : i64, tpu.core_type = #tpu.core_type<tc>, window_params = [{transform_indices = @transform_0, window_bounds = array<i64: 1, 8, 8, 4>}, {pipeline_mode = #tpu.pipeline_mode<synchronous>, transform_indices = @transform_1, window_bounds = array<i64: 36, 128>}, {pipeline_mode = #tpu.pipeline_mode<synchronous>, transform_indices = @transform_2, window_bounds = array<i64: 1152, 128>}, {transform_indices = @transform_3, window_bounds = array<i64: 1, 64, 128>}]} {
    %cst = arith.constant 0.000000e+00 : f32
    %0 = vector.broadcast %cst : f32 to vector<1x10x4xf32>
    %cst_0 = arith.constant 0.000000e+00 : f32
    %1 = vector.broadcast %cst_0 : f32 to vector<10x1x4xf32>
    %c0 = arith.constant 0 : index
    %c0_1 = arith.constant 0 : index
    %c0_2 = arith.constant 0 : index
    %2 = vector.load %arg5[%c0, %c0_1, %c0_2] : memref<10x10x4xf32, #tpu.memory_space<vmem>>, vector<1x10x4xf32>
    tpu.vector_store %arg5[%c0, %c0_1, %c0_2], %0 {strides = array<i32>} : memref<10x10x4xf32, #tpu.memory_space<vmem>>, vector<1x10x4xf32>,
    %c9 = arith.constant 9 : index
    %c0_3 = arith.constant 0 : index
    %c0_4 = arith.constant 0 : index
    %3 = vector.load %arg5[%c9, %c0_3, %c0_4] : memref<10x10x4xf32, #tpu.memory_space<vmem>>, vector<1x10x4xf32>
    tpu.vector_store %arg5[%c9, %c0_3, %c0_4], %0 {strides = array<i32>} : memref<10x10x4xf32, #tpu.memory_space<vmem>>, vector<1x10x4xf32>,
    %c0_5 = arith.constant 0 : index
    %c0_6 = arith.constant 0 : index
    %c0_7 = arith.constant 0 : index
    %4 = vector.load %arg5[%c0_5, %c0_6, %c0_7] : memref<10x10x4xf32, #tpu.memory_space<vmem>>, vector<10x1x4xf32>
    tpu.vector_store %arg5[%c0_5, %c0_6, %c0_7], %1 {strides = array<i32>} : memref<10x10x4xf32, #tpu.memory_space<vmem>>, vector<10x1x4xf32>,
    %c0_8 = arith.constant 0 : index
    %c9_9 = arith.constant 9 : index
    %c0_10 = arith.constant 0 : index
    %5 = vector.load %arg5[%c0_8, %c9_9, %c0_10] : memref<10x10x4xf32, #tpu.memory_space<vmem>>, vector<10x1x4xf32>
    tpu.vector_store %arg5[%c0_8, %c9_9, %c0_10], %1 {strides = array<i32>} : memref<10x10x4xf32, #tpu.memory_space<vmem>>, vector<10x1x4xf32>,
    %cst_11 = arith.constant 0.000000e+00 : f32
    %6 = vector.broadcast %cst_11 : f32 to vector<1x10x128xf32>
    %cst_12 = arith.constant 0.000000e+00 : f32
    %7 = vector.broadcast %cst_12 : f32 to vector<10x1x128xf32>
    %c0_13 = arith.constant 0 : index
    %c0_14 = arith.constant 0 : index
    %c0_15 = arith.constant 0 : index
    %8 = vector.load %arg6[%c0_13, %c0_14, %c0_15] : memref<10x10x128xf32, #tpu.memory_space<vmem>>, vector<1x10x128xf32>
    tpu.vector_store %arg6[%c0_13, %c0_14, %c0_15], %6 {strides = array<i32>} : memref<10x10x128xf32, #tpu.memory_space<vmem>>, vector<1x10x128xf32>,
    %c9_16 = arith.constant 9 : index
    %c0_17 = arith.constant 0 : index
    %c0_18 = arith.constant 0 : index
    %9 = vector.load %arg6[%c9_16, %c0_17, %c0_18] : memref<10x10x128xf32, #tpu.memory_space<vmem>>, vector<1x10x128xf32>
    tpu.vector_store %arg6[%c9_16, %c0_17, %c0_18], %6 {strides = array<i32>} : memref<10x10x128xf32, #tpu.memory_space<vmem>>, vector<1x10x128xf32>,
    %c0_19 = arith.constant 0 : index
    %c0_20 = arith.constant 0 : index
    %c0_21 = arith.constant 0 : index
    %10 = vector.load %arg6[%c0_19, %c0_20, %c0_21] : memref<10x10x128xf32, #tpu.memory_space<vmem>>, vector<10x1x128xf32>
    tpu.vector_store %arg6[%c0_19, %c0_20, %c0_21], %7 {strides = array<i32>} : memref<10x10x128xf32, #tpu.memory_space<vmem>>, vector<10x1x128xf32>,
    %c0_22 = arith.constant 0 : index
    %c9_23 = arith.constant 9 : index
    %c0_24 = arith.constant 0 : index
    %11 = vector.load %arg6[%c0_22, %c9_23, %c0_24] : memref<10x10x128xf32, #tpu.memory_space<vmem>>, vector<10x1x128xf32>
    tpu.vector_store %arg6[%c0_22, %c9_23, %c0_24], %7 {strides = array<i32>} : memref<10x10x128xf32, #tpu.memory_space<vmem>>, vector<10x1x128xf32>,
    %c0_25 = arith.constant 0 : index
    %c0_26 = arith.constant 0 : index
    %c0_27 = arith.constant 0 : index
    %c0_28 = arith.constant 0 : index
    %12 = vector.load %arg1[%c0_25, %c0_26, %c0_27, %c0_28] : memref<1x8x8x4xf32, #tpu.memory_space<vmem>>, vector<1x8x8x4xf32>
    %13 = vector.shape_cast %12 : vector<1x8x8x4xf32> to vector<8x8x4xf32>
    %c1 = arith.constant 1 : index
    %c1_29 = arith.constant 1 : index
    %c0_30 = arith.constant 0 : index
    %14 = vector.load %arg5[%c1, %c1_29, %c0_30] : memref<10x10x4xf32, #tpu.memory_space<vmem>>, vector<8x8x4xf32>
    tpu.vector_store %arg5[%c1, %c1_29, %c0_30], %13 {strides = array<i32>} : memref<10x10x4xf32, #tpu.memory_space<vmem>>, vector<8x8x4xf32>,
    %c0_31 = arith.constant 0 : index
    %c0_32 = arith.constant 0 : index
    %c0_33 = arith.constant 0 : index
    %15 = vector.load %arg5[%c0_31, %c0_32, %c0_33] : memref<10x10x4xf32, #tpu.memory_space<vmem>>, vector<8x8x4xf32>
    %16 = vector.shape_cast %15 : vector<8x8x4xf32> to vector<64x4xf32>
    %c0_34 = arith.constant 0 : index
    %c0_35 = arith.constant 0 : index
    %17 = vector.load %arg7[%c0_34, %c0_35] : memref<64x36xf32, #tpu.memory_space<vmem>>, vector<64x4xf32>
    tpu.vector_store %arg7[%c0_34, %c0_35], %16 {strides = array<i32>} : memref<64x36xf32, #tpu.memory_space<vmem>>, vector<64x4xf32>,
    %c0_36 = arith.constant 0 : index
    %c1_37 = arith.constant 1 : index
    %c0_38 = arith.constant 0 : index
    %18 = vector.load %arg5[%c0_36, %c1_37, %c0_38] : memref<10x10x4xf32, #tpu.memory_space<vmem>>, vector<8x8x4xf32>
    %19 = vector.shape_cast %18 : vector<8x8x4xf32> to vector<64x4xf32>
    %c0_39 = arith.constant 0 : index
    %c4 = arith.constant 4 : index
    %20 = vector.load %arg7[%c0_39, %c4] : memref<64x36xf32, #tpu.memory_space<vmem>>, vector<64x4xf32>
    tpu.vector_store %arg7[%c0_39, %c4], %19 {strides = array<i32>} : memref<64x36xf32, #tpu.memory_space<vmem>>, vector<64x4xf32>,
    %c0_40 = arith.constant 0 : index
    %c2 = arith.constant 2 : index
    %c0_41 = arith.constant 0 : index
    %21 = vector.load %arg5[%c0_40, %c2, %c0_41] : memref<10x10x4xf32, #tpu.memory_space<vmem>>, vector<8x8x4xf32>
    %22 = vector.shape_cast %21 : vector<8x8x4xf32> to vector<64x4xf32>
    %c0_42 = arith.constant 0 : index
    %c8 = arith.constant 8 : index
    %23 = vector.load %arg7[%c0_42, %c8] : memref<64x36xf32, #tpu.memory_space<vmem>>, vector<64x4xf32>
    tpu.vector_store %arg7[%c0_42, %c8], %22 {strides = array<i32>} : memref<64x36xf32, #tpu.memory_space<vmem>>, vector<64x4xf32>,
    %c1_43 = arith.constant 1 : index
    %c0_44 = arith.constant 0 : index
    %c0_45 = arith.constant 0 : index
    %24 = vector.load %arg5[%c1_43, %c0_44, %c0_45] : memref<10x10x4xf32, #tpu.memory_space<vmem>>, vector<8x8x4xf32>
    %25 = vector.shape_cast %24 : vector<8x8x4xf32> to vector<64x4xf32>
    %c0_46 = arith.constant 0 : index
    %c12 = arith.constant 12 : index
    %26 = vector.load %arg7[%c0_46, %c12] : memref<64x36xf32, #tpu.memory_space<vmem>>, vector<64x4xf32>
    tpu.vector_store %arg7[%c0_46, %c12], %25 {strides = array<i32>} : memref<64x36xf32, #tpu.memory_space<vmem>>, vector<64x4xf32>,
    %c1_47 = arith.constant 1 : index
    %c1_48 = arith.constant 1 : index
    %c0_49 = arith.constant 0 : index
    %27 = vector.load %arg5[%c1_47, %c1_48, %c0_49] : memref<10x10x4xf32, #tpu.memory_space<vmem>>, vector<8x8x4xf32>
    %28 = vector.shape_cast %27 : vector<8x8x4xf32> to vector<64x4xf32>
    %c0_50 = arith.constant 0 : index
    %c16 = arith.constant 16 : index
    %29 = vector.load %arg7[%c0_50, %c16] : memref<64x36xf32, #tpu.memory_space<vmem>>, vector<64x4xf32>
    tpu.vector_store %arg7[%c0_50, %c16], %28 {strides = array<i32>} : memref<64x36xf32, #tpu.memory_space<vmem>>, vector<64x4xf32>,
    %c1_51 = arith.constant 1 : index
    %c2_52 = arith.constant 2 : index
    %c0_53 = arith.constant 0 : index
    %30 = vector.load %arg5[%c1_51, %c2_52, %c0_53] : memref<10x10x4xf32, #tpu.memory_space<vmem>>, vector<8x8x4xf32>
    %31 = vector.shape_cast %30 : vector<8x8x4xf32> to vector<64x4xf32>
    %c0_54 = arith.constant 0 : index
    %c20 = arith.constant 20 : index
    %32 = vector.load %arg7[%c0_54, %c20] : memref<64x36xf32, #tpu.memory_space<vmem>>, vector<64x4xf32>
    tpu.vector_store %arg7[%c0_54, %c20], %31 {strides = array<i32>} : memref<64x36xf32, #tpu.memory_space<vmem>>, vector<64x4xf32>,
    %c2_55 = arith.constant 2 : index
    %c0_56 = arith.constant 0 : index
    %c0_57 = arith.constant 0 : index
    %33 = vector.load %arg5[%c2_55, %c0_56, %c0_57] : memref<10x10x4xf32, #tpu.memory_space<vmem>>, vector<8x8x4xf32>
    %34 = vector.shape_cast %33 : vector<8x8x4xf32> to vector<64x4xf32>
    %c0_58 = arith.constant 0 : index
    %c24 = arith.constant 24 : index
    %35 = vector.load %arg7[%c0_58, %c24] : memref<64x36xf32, #tpu.memory_space<vmem>>, vector<64x4xf32>
    tpu.vector_store %arg7[%c0_58, %c24], %34 {strides = array<i32>} : memref<64x36xf32, #tpu.memory_space<vmem>>, vector<64x4xf32>,
    %c2_59 = arith.constant 2 : index
    %c1_60 = arith.constant 1 : index
    %c0_61 = arith.constant 0 : index
    %36 = vector.load %arg5[%c2_59, %c1_60, %c0_61] : memref<10x10x4xf32, #tpu.memory_space<vmem>>, vector<8x8x4xf32>
    %37 = vector.shape_cast %36 : vector<8x8x4xf32> to vector<64x4xf32>
    %c0_62 = arith.constant 0 : index
    %c28 = arith.constant 28 : index
    %38 = vector.load %arg7[%c0_62, %c28] : memref<64x36xf32, #tpu.memory_space<vmem>>, vector<64x4xf32>
    tpu.vector_store %arg7[%c0_62, %c28], %37 {strides = array<i32>} : memref<64x36xf32, #tpu.memory_space<vmem>>, vector<64x4xf32>,
    %c2_63 = arith.constant 2 : index
    %c2_64 = arith.constant 2 : index
    %c0_65 = arith.constant 0 : index
    %39 = vector.load %arg5[%c2_63, %c2_64, %c0_65] : memref<10x10x4xf32, #tpu.memory_space<vmem>>, vector<8x8x4xf32>
    %40 = vector.shape_cast %39 : vector<8x8x4xf32> to vector<64x4xf32>
    %c0_66 = arith.constant 0 : index
    %c32 = arith.constant 32 : index
    %41 = vector.load %arg7[%c0_66, %c32] : memref<64x36xf32, #tpu.memory_space<vmem>>, vector<64x4xf32>
    tpu.vector_store %arg7[%c0_66, %c32], %40 {strides = array<i32>} : memref<64x36xf32, #tpu.memory_space<vmem>>, vector<64x4xf32>,
    %c0_67 = arith.constant 0 : index
    %c0_68 = arith.constant 0 : index
    %42 = vector.load %arg7[%c0_67, %c0_68] : memref<64x36xf32, #tpu.memory_space<vmem>>, vector<64x36xf32>
    %c0_69 = arith.constant 0 : index
    %c0_70 = arith.constant 0 : index
    %43 = vector.load %arg2[%c0_69, %c0_70] : memref<36x128xf32, #tpu.memory_space<vmem>>, vector<36x128xf32>
    %cst_71 = arith.constant dense<0.000000e+00> : vector<64x128xf32>
    %44 = tpu.matmul %42, %43, %cst_71 {dimension_numbers = #tpu.dot_dimension_numbers<[1], [0], [0], [1], [0, 0, 1, 1], [], []>} : vector<64x36xf32>, vector<36x128xf32>, vector<64x128xf32> -> vector<64x128xf32>
    %cst_72 = arith.constant dense<0.000000e+00> : vector<128xf32>
    %45 = vector.multi_reduction <add>, %44, %cst_72 [0] : vector<64x128xf32> to vector<128xf32>
    %46 = vector.shape_cast %45 : vector<128xf32> to vector<1x128xf32>
    %cst_73 = arith.constant 6.400000e+01 : f32
    %47 = vector.broadcast %cst_73 : f32 to vector<1x128xf32>
    %48 = arith.divf %46, %47 : vector<1x128xf32>
    %49 = arith.mulf %44, %44 : vector<64x128xf32>
    %cst_74 = arith.constant dense<0.000000e+00> : vector<128xf32>
    %50 = vector.multi_reduction <add>, %49, %cst_74 [0] : vector<64x128xf32> to vector<128xf32>
    %51 = vector.shape_cast %50 : vector<128xf32> to vector<1x128xf32>
    %cst_75 = arith.constant 6.400000e+01 : f32
    %52 = vector.broadcast %cst_75 : f32 to vector<1x128xf32>
    %53 = arith.divf %51, %52 : vector<1x128xf32>
    %54 = arith.mulf %48, %48 : vector<1x128xf32>
    %55 = arith.subf %53, %54 : vector<1x128xf32>
    %cst_76 = arith.constant 0.000000e+00 : f32
    %56 = vector.broadcast %cst_76 : f32 to vector<1x128xf32>
    %57 = arith.maximumf %55, %56 : vector<1x128xf32>
    %58 = vector.broadcast %48 : vector<1x128xf32> to vector<64x128xf32>
    %59 = arith.subf %44, %58 : vector<64x128xf32>
    %cst_77 = arith.constant 9.99999974E-6 : f32
    %60 = vector.broadcast %cst_77 : f32 to vector<1x128xf32>
    %61 = arith.addf %57, %60 : vector<1x128xf32>
    %62 = math.rsqrt %61 : vector<1x128xf32>
    %63 = vector.broadcast %62 : vector<1x128xf32> to vector<64x128xf32>
    %64 = arith.mulf %59, %63 : vector<64x128xf32>
    %cst_78 = arith.constant 2.000000e-01 : f32
    %65 = vector.broadcast %cst_78 : f32 to vector<64x128xf32>
    %66 = arith.mulf %65, %64 : vector<64x128xf32>
    %67 = arith.maximumf %64, %66 : vector<64x128xf32>
    %68 = vector.shape_cast %67 : vector<64x128xf32> to vector<8x8x128xf32>
    %c1_79 = arith.constant 1 : index
    %c1_80 = arith.constant 1 : index
    %c0_81 = arith.constant 0 : index
    %69 = vector.load %arg6[%c1_79, %c1_80, %c0_81] : memref<10x10x128xf32, #tpu.memory_space<vmem>>, vector<8x8x128xf32>
    tpu.vector_store %arg6[%c1_79, %c1_80, %c0_81], %68 {strides = array<i32>} : memref<10x10x128xf32, #tpu.memory_space<vmem>>, vector<8x8x128xf32>,
    %c0_82 = arith.constant 0 : index
    %c0_83 = arith.constant 0 : index
    %c0_84 = arith.constant 0 : index
    %70 = vector.load %arg6[%c0_82, %c0_83, %c0_84] : memref<10x10x128xf32, #tpu.memory_space<vmem>>, vector<8x8x128xf32>
    %71 = vector.shape_cast %70 : vector<8x8x128xf32> to vector<64x128xf32>
    %c0_85 = arith.constant 0 : index
    %c0_86 = arith.constant 0 : index
    %72 = vector.load %arg8[%c0_85, %c0_86] : memref<64x1152xf32, #tpu.memory_space<vmem>>, vector<64x128xf32>
    tpu.vector_store %arg8[%c0_85, %c0_86], %71 {strides = array<i32>} : memref<64x1152xf32, #tpu.memory_space<vmem>>, vector<64x128xf32>,
    %c0_87 = arith.constant 0 : index
    %c1_88 = arith.constant 1 : index
    %c0_89 = arith.constant 0 : index
    %73 = vector.load %arg6[%c0_87, %c1_88, %c0_89] : memref<10x10x128xf32, #tpu.memory_space<vmem>>, vector<8x8x128xf32>
    %74 = vector.shape_cast %73 : vector<8x8x128xf32> to vector<64x128xf32>
    %c0_90 = arith.constant 0 : index
    %c128 = arith.constant 128 : index
    %75 = vector.load %arg8[%c0_90, %c128] : memref<64x1152xf32, #tpu.memory_space<vmem>>, vector<64x128xf32>
    tpu.vector_store %arg8[%c0_90, %c128], %74 {strides = array<i32>} : memref<64x1152xf32, #tpu.memory_space<vmem>>, vector<64x128xf32>,
    %c0_91 = arith.constant 0 : index
    %c2_92 = arith.constant 2 : index
    %c0_93 = arith.constant 0 : index
    %76 = vector.load %arg6[%c0_91, %c2_92, %c0_93] : memref<10x10x128xf32, #tpu.memory_space<vmem>>, vector<8x8x128xf32>
    %77 = vector.shape_cast %76 : vector<8x8x128xf32> to vector<64x128xf32>
    %c0_94 = arith.constant 0 : index
    %c256 = arith.constant 256 : index
    %78 = vector.load %arg8[%c0_94, %c256] : memref<64x1152xf32, #tpu.memory_space<vmem>>, vector<64x128xf32>
    tpu.vector_store %arg8[%c0_94, %c256], %77 {strides = array<i32>} : memref<64x1152xf32, #tpu.memory_space<vmem>>, vector<64x128xf32>,
    %c1_95 = arith.constant 1 : index
    %c0_96 = arith.constant 0 : index
    %c0_97 = arith.constant 0 : index
    %79 = vector.load %arg6[%c1_95, %c0_96, %c0_97] : memref<10x10x128xf32, #tpu.memory_space<vmem>>, vector<8x8x128xf32>
    %80 = vector.shape_cast %79 : vector<8x8x128xf32> to vector<64x128xf32>
    %c0_98 = arith.constant 0 : index
    %c384 = arith.constant 384 : index
    %81 = vector.load %arg8[%c0_98, %c384] : memref<64x1152xf32, #tpu.memory_space<vmem>>, vector<64x128xf32>
    tpu.vector_store %arg8[%c0_98, %c384], %80 {strides = array<i32>} : memref<64x1152xf32, #tpu.memory_space<vmem>>, vector<64x128xf32>,
    %c1_99 = arith.constant 1 : index
    %c1_100 = arith.constant 1 : index
    %c0_101 = arith.constant 0 : index
    %82 = vector.load %arg6[%c1_99, %c1_100, %c0_101] : memref<10x10x128xf32, #tpu.memory_space<vmem>>, vector<8x8x128xf32>
    %83 = vector.shape_cast %82 : vector<8x8x128xf32> to vector<64x128xf32>
    %c0_102 = arith.constant 0 : index
    %c512 = arith.constant 512 : index
    %84 = vector.load %arg8[%c0_102, %c512] : memref<64x1152xf32, #tpu.memory_space<vmem>>, vector<64x128xf32>
    tpu.vector_store %arg8[%c0_102, %c512], %83 {strides = array<i32>} : memref<64x1152xf32, #tpu.memory_space<vmem>>, vector<64x128xf32>,
    %c1_103 = arith.constant 1 : index
    %c2_104 = arith.constant 2 : index
    %c0_105 = arith.constant 0 : index
    %85 = vector.load %arg6[%c1_103, %c2_104, %c0_105] : memref<10x10x128xf32, #tpu.memory_space<vmem>>, vector<8x8x128xf32>
    %86 = vector.shape_cast %85 : vector<8x8x128xf32> to vector<64x128xf32>
    %c0_106 = arith.constant 0 : index
    %c640 = arith.constant 640 : index
    %87 = vector.load %arg8[%c0_106, %c640] : memref<64x1152xf32, #tpu.memory_space<vmem>>, vector<64x128xf32>
    tpu.vector_store %arg8[%c0_106, %c640], %86 {strides = array<i32>} : memref<64x1152xf32, #tpu.memory_space<vmem>>, vector<64x128xf32>,
    %c2_107 = arith.constant 2 : index
    %c0_108 = arith.constant 0 : index
    %c0_109 = arith.constant 0 : index
    %88 = vector.load %arg6[%c2_107, %c0_108, %c0_109] : memref<10x10x128xf32, #tpu.memory_space<vmem>>, vector<8x8x128xf32>
    %89 = vector.shape_cast %88 : vector<8x8x128xf32> to vector<64x128xf32>
    %c0_110 = arith.constant 0 : index
    %c768 = arith.constant 768 : index
    %90 = vector.load %arg8[%c0_110, %c768] : memref<64x1152xf32, #tpu.memory_space<vmem>>, vector<64x128xf32>
    tpu.vector_store %arg8[%c0_110, %c768], %89 {strides = array<i32>} : memref<64x1152xf32, #tpu.memory_space<vmem>>, vector<64x128xf32>,
    %c2_111 = arith.constant 2 : index
    %c1_112 = arith.constant 1 : index
    %c0_113 = arith.constant 0 : index
    %91 = vector.load %arg6[%c2_111, %c1_112, %c0_113] : memref<10x10x128xf32, #tpu.memory_space<vmem>>, vector<8x8x128xf32>
    %92 = vector.shape_cast %91 : vector<8x8x128xf32> to vector<64x128xf32>
    %c0_114 = arith.constant 0 : index
    %c896 = arith.constant 896 : index
    %93 = vector.load %arg8[%c0_114, %c896] : memref<64x1152xf32, #tpu.memory_space<vmem>>, vector<64x128xf32>
    tpu.vector_store %arg8[%c0_114, %c896], %92 {strides = array<i32>} : memref<64x1152xf32, #tpu.memory_space<vmem>>, vector<64x128xf32>,
    %c2_115 = arith.constant 2 : index
    %c2_116 = arith.constant 2 : index
    %c0_117 = arith.constant 0 : index
    %94 = vector.load %arg6[%c2_115, %c2_116, %c0_117] : memref<10x10x128xf32, #tpu.memory_space<vmem>>, vector<8x8x128xf32>
    %95 = vector.shape_cast %94 : vector<8x8x128xf32> to vector<64x128xf32>
    %c0_118 = arith.constant 0 : index
    %c1024 = arith.constant 1024 : index
    %96 = vector.load %arg8[%c0_118, %c1024] : memref<64x1152xf32, #tpu.memory_space<vmem>>, vector<64x128xf32>
    tpu.vector_store %arg8[%c0_118, %c1024], %95 {strides = array<i32>} : memref<64x1152xf32, #tpu.memory_space<vmem>>, vector<64x128xf32>,
    %c0_119 = arith.constant 0 : index
    %c0_120 = arith.constant 0 : index
    %97 = vector.load %arg8[%c0_119, %c0_120] : memref<64x1152xf32, #tpu.memory_space<vmem>>, vector<64x1152xf32>
    %c0_121 = arith.constant 0 : index
    %c0_122 = arith.constant 0 : index
    %98 = vector.load %arg3[%c0_121, %c0_122] : memref<1152x128xf32, #tpu.memory_space<vmem>>, vector<1152x128xf32>
    %cst_123 = arith.constant dense<0.000000e+00> : vector<64x128xf32>
    %99 = tpu.matmul %97, %98, %cst_123 {dimension_numbers = #tpu.dot_dimension_numbers<[1], [0], [0], [1], [0, 0, 1, 1], [], []>} : vector<64x1152xf32>, vector<1152x128xf32>, vector<64x128xf32> -> vector<64x128xf32>
    %cst_124 = arith.constant dense<0.000000e+00> : vector<128xf32>
    %100 = vector.multi_reduction <add>, %99, %cst_124 [0] : vector<64x128xf32> to vector<128xf32>
    %101 = vector.shape_cast %100 : vector<128xf32> to vector<1x128xf32>
    %cst_125 = arith.constant 6.400000e+01 : f32
    %102 = vector.broadcast %cst_125 : f32 to vector<1x128xf32>
    %103 = arith.divf %101, %102 : vector<1x128xf32>
    %104 = arith.mulf %99, %99 : vector<64x128xf32>
    %cst_126 = arith.constant dense<0.000000e+00> : vector<128xf32>
    %105 = vector.multi_reduction <add>, %104, %cst_126 [0] : vector<64x128xf32> to vector<128xf32>
    %106 = vector.shape_cast %105 : vector<128xf32> to vector<1x128xf32>
    %cst_127 = arith.constant 6.400000e+01 : f32
    %107 = vector.broadcast %cst_127 : f32 to vector<1x128xf32>
    %108 = arith.divf %106, %107 : vector<1x128xf32>
    %109 = arith.mulf %103, %103 : vector<1x128xf32>
    %110 = arith.subf %108, %109 : vector<1x128xf32>
    %cst_128 = arith.constant 0.000000e+00 : f32
    %111 = vector.broadcast %cst_128 : f32 to vector<1x128xf32>
    %112 = arith.maximumf %110, %111 : vector<1x128xf32>
    %113 = vector.broadcast %103 : vector<1x128xf32> to vector<64x128xf32>
    %114 = arith.subf %99, %113 : vector<64x128xf32>
    %cst_129 = arith.constant 9.99999974E-6 : f32
    %115 = vector.broadcast %cst_129 : f32 to vector<1x128xf32>
    %116 = arith.addf %112, %115 : vector<1x128xf32>
    %117 = math.rsqrt %116 : vector<1x128xf32>
    %118 = vector.broadcast %117 : vector<1x128xf32> to vector<64x128xf32>
    %119 = arith.mulf %114, %118 : vector<64x128xf32>
    %cst_130 = arith.constant 2.000000e-01 : f32
    %120 = vector.broadcast %cst_130 : f32 to vector<64x128xf32>
    %121 = arith.mulf %120, %119 : vector<64x128xf32>
    %122 = arith.maximumf %119, %121 : vector<64x128xf32>
    %c0_131 = arith.constant 0 : index
    %c0_132 = arith.constant 0 : index
    %c0_133 = arith.constant 0 : index
    %123 = vector.load %arg4[%c0_131, %c0_132, %c0_133] : memref<1x64x128xf32, #tpu.memory_space<vmem>>, vector<1x64x128xf32>
    %124 = vector.shape_cast %123 : vector<1x64x128xf32> to vector<64x128xf32>
    %125 = vector.shape_cast %122 : vector<64x128xf32> to vector<1x64x128xf32>
    tpu.vector_store %arg4[%c0_131, %c0_132, %c0_133], %125 {strides = array<i32>} : memref<1x64x128xf32, #tpu.memory_space<vmem>>, vector<1x64x128xf32>,
    return
  }
  func.func @transform_0(%arg0: i32) -> (i32, i32, i32, i32) {
    %c0_i32 = arith.constant 0 : i32
    %c0_i32_0 = arith.constant 0 : i32
    %c0_i32_1 = arith.constant 0 : i32
    %c0_i32_2 = arith.constant 0 : i32
    return %arg0, %c0_i32, %c0_i32_0, %c0_i32_1 : i32, i32, i32, i32
  }
  func.func @transform_1(%arg0: i32) -> (i32, i32) {
    %c0_i32 = arith.constant 0 : i32
    %c0_i32_0 = arith.constant 0 : i32
    %c0_i32_1 = arith.constant 0 : i32
    return %c0_i32, %c0_i32_0 : i32, i32
  }
  func.func @transform_2(%arg0: i32) -> (i32, i32) {
    %c0_i32 = arith.constant 0 : i32
    %c0_i32_0 = arith.constant 0 : i32
    %c0_i32_1 = arith.constant 0 : i32
    return %c0_i32, %c0_i32_0 : i32, i32
  }
  func.func @transform_3(%arg0: i32) -> (i32, i32, i32) {
    %c0_i32 = arith.constant 0 : i32
    %c0_i32_0 = arith.constant 0 : i32
    %c0_i32_1 = arith.constant 0 : i32
    return %arg0, %c0_i32, %c0_i32_0 : i32, i32, i32
  }
}

</mosaic_0001>

<llo_original>
// kernel: down_forward.1
$region0: #{down_forward.1}
  #allocation0 [shape = 'u32[]', space=smem, size = 0x4, offset = 0x4, fixed_abs, tag = 'smem constant byte address 0x4 - core index']
  #allocation1 [shape = 'u32[144,128]{1,0:T(1,128)}', space=vmem, size = 0x12000, scoped, tag = 'internal scratch']
  #allocation2 [shape = 'f32[10,10,4]{2,1,0:T(8,128)}', space=vmem, size = 0x14000, scoped, tag = 'scratch operand']
  #allocation3 [shape = 'f32[10,10,128]{2,1,0:T(8,128)}', space=vmem, size = 0x14000, scoped, tag = 'scratch operand']
  #allocation4 [shape = 'f32[64,36]{1,0:T(8,128)}', space=vmem, size = 0x8000, scoped, tag = 'scratch operand']
  #allocation5 [shape = 'f32[64,1152]{1,0:T(8,128)}', space=vmem, size = 0x48000, scoped, tag = 'scratch operand']
  %s0 = inlined_call_operand.vmem [shape: f32[2,8,8,4], index: 0, kind: input, shape index: {}]
  %s1 = inlined_call_operand.vmem [shape: f32[36,128], index: 1, kind: input, shape index: {}]
  %s2 = inlined_call_operand.vmem [shape: f32[1152,128], index: 2, kind: input, shape index: {}]
  %s3 = inlined_call_operand.vmem [shape: f32[2,64,128], index: 3, kind: output, shape index: {}]
  %s4 = sld [smem:[#allocation0]]
  $region45: #{down_forward.1} parent=0
    _
  %s6 = ssub.s32 1, %s4
  %s7 = scalar_select 0, %s6, %s4
  loop: start=0, step=1, limit=4
  $region2: #{down_forward.1} parent=0 // loop_pre_header
    _
  $region3: #{down_forward.1} parent=0 // loop_header
    %s9 = sphi 0, %s13
    %p10 = scmp.ge.s32.totalorder %s9, 4
    %s19 = sphi 0, %s21
    %s22 = sphi 0, %s19
    %s23 = sphi 0, %s22
    %s39 = sphi 0, %s23
    %s43 = sphi 0, %s43
    %s45 = sphi 0, %s43
    %s46 = sphi 0, %s45
    %s60 = sphi 0, %s46
    %s64 = sphi 0, %s64
    %s66 = sphi 0, %s64
    %s67 = sphi 0, %s66
    %s81 = sphi 0, %s67
    %s87 = sphi 0, %s89
    %s90 = sphi 0, %s87
    %s91 = sphi 0, %s90
    %s107 = sphi 0, %s91
  $region4: #{down_forward.1} parent=0 // loop_header_branch
    %12 = sbr.rel (%p10) target = $region8
  $region5: #{down_forward.1} parent=0 // loop_body
    %s14 = ssub.s32 %s9, 1
    %s15 = ssub.s32 %s9, 2
    %s16 = sadd.s32 %s9, 1
    %s17 = ssub.s32 %s9, %s16
    %p18 = scmp.eq.s32.totalorder %s17, 0
    %s20 = sadd.s32 %s19, 1
    %s21 = scalar_select %p18, %s19, %s20
    %p24 = pneg %p18
    %p25 = scmp.eq.s32.totalorder %s9, 1
    %p26 = por %p24, %p25
    %p27 = scmp.ne.s32.totalorder %s19, %s22
    %p28 = scmp.eq.s32.totalorder %s9, 0
    %p29 = por %p27, %p28
    %p30 = scmp.ne.s32.totalorder %s19, %s22
    %p31 = scmp.eq.s32.totalorder %s14, 1
    %p32 = por %p30, %p31
    %p33 = scmp.ne.s32.totalorder %s22, %s23
    %p34 = scmp.eq.s32.totalorder %s14, 0
    %p35 = por %p33, %p34
    %p36 = scmp.ne.s32.totalorder %s22, %s23
    %p37 = scmp.eq.s32.totalorder %s15, 1
    %p38 = por %p36, %p37
    %p40 = scmp.ne.s32.totalorder %s23, %s39
    %p41 = scmp.eq.s32.totalorder %s15, 0
    %p42 = por %p40, %p41
    %s44 = sadd.s32 %s43, 1
    %p47 = scmp.eq.s32.totalorder %s9, 1
    %p48 = scmp.ne.s32.totalorder %s43, %s45
    %p49 = scmp.eq.s32.totalorder %s9, 0
    %p50 = por %p48, %p49
    %p51 = scmp.ne.s32.totalorder %s43, %s45
    %p52 = scmp.eq.s32.totalorder %s14, 1
    %p53 = por %p51, %p52
    %p54 = scmp.ne.s32.totalorder %s45, %s46
    %p55 = scmp.eq.s32.totalorder %s14, 0
    %p56 = por %p54, %p55
    %p57 = scmp.ne.s32.totalorder %s45, %s46
    %p58 = scmp.eq.s32.totalorder %s15, 1
    %p59 = por %p57, %p58
    %p61 = scmp.ne.s32.totalorder %s46, %s60
    %p62 = scmp.eq.s32.totalorder %s15, 0
    %p63 = por %p61, %p62
    %s65 = sadd.s32 %s64, 1
    %p68 = scmp.eq.s32.totalorder %s9, 1
    %p69 = scmp.ne.s32.totalorder %s64, %s66
    %p70 = scmp.eq.s32.totalorder %s9, 0
    %p71 = por %p69, %p70
    %p72 = scmp.ne.s32.totalorder %s64, %s66
    %p73 = scmp.eq.s32.totalorder %s14, 1
    %p74 = por %p72, %p73
    %p75 = scmp.ne.s32.totalorder %s66, %s67
    %p76 = scmp.eq.s32.totalorder %s14, 0
    %p77 = por %p75, %p76
    %p78 = scmp.ne.s32.totalorder %s66, %s67
    %p79 = scmp.eq.s32.totalorder %s15, 1
    %p80 = por %p78, %p79
    %p82 = scmp.ne.s32.totalorder %s67, %s81
    %p83 = scmp.eq.s32.totalorder %s15, 0
    %p84 = por %p82, %p83
    %s85 = ssub.s32 %s9, %s16
    %p86 = scmp.eq.s32.totalorder %s85, 0
    %s88 = sadd.s32 %s87, 1
    %s89 = scalar_select %p86, %s87, %s88
    %p92 = pneg %p86
    %p93 = scmp.eq.s32.totalorder %s9, 1
    %p94 = por %p92, %p93
    %p95 = scmp.ne.s32.totalorder %s87, %s90
    %p96 = scmp.eq.s32.totalorder %s9, 0
    %p97 = por %p95, %p96
    %p98 = scmp.ne.s32.totalorder %s87, %s90
    %p99 = scmp.eq.s32.totalorder %s14, 1
    %p100 = por %p98, %p99
    %p101 = scmp.ne.s32.totalorder %s90, %s91
    %p102 = scmp.eq.s32.totalorder %s14, 0
    %p103 = por %p101, %p102
    %p104 = scmp.ne.s32.totalorder %s90, %s91
    %p105 = scmp.eq.s32.totalorder %s15, 1
    %p106 = por %p104, %p105
    %p108 = scmp.ne.s32.totalorder %s91, %s107
    %p109 = scmp.eq.s32.totalorder %s15, 0
    %p110 = por %p108, %p109
    %p111 = scmp.le.s32.totalorder 1, %s9
    %p112 = scmp.lt.s32.totalorder %s9, 3
    %p113 = pnand %p111, %p112
    %p114 = pneg %p113
    // Predicated region
    $region9: #{down_forward.1} parent=5 // pred_check
      _
    $region10: #{down_forward.1} parent=5 // pred_check_branch
      %116 = sbr.rel (%p113) target = $region12
    $region11: #{down_forward.1} parent=5 // pred_region
      %s117 = ssub.s32 %s9, 1
      // Predicated region
      $region13: #{down_forward.1} parent=11 // pred_check
        %p118 = pneg %p56
      $region14: #{down_forward.1} parent=11 // pred_check_branch
        %120 = sbr.rel (%p118) target = $region16
      $region15: #{down_forward.1} parent=11 // pred_region
        _
      $region16: #{down_forward.1} parent=11 // pred_fallthru
        _
      // Predicated region
      $region17: #{down_forward.1} parent=11 // pred_check
        %p121 = pneg %p77
      $region18: #{down_forward.1} parent=11 // pred_check_branch
        %123 = sbr.rel (%p121) target = $region20
      $region19: #{down_forward.1} parent=11 // pred_region
        _
      $region20: #{down_forward.1} parent=11 // pred_fallthru
        _
    $region12: #{down_forward.1} parent=5 // pred_fallthru
      _
    %p124 = scmp.lt.s32.totalorder %s9, 2
    // Predicated region
    $region21: #{down_forward.1} parent=5 // pred_check
      %p125 = pneg %p124
    $region22: #{down_forward.1} parent=5 // pred_check_branch
      %127 = sbr.rel (%p125) target = $region24
    $region23: #{down_forward.1} parent=5 // pred_region
      // Predicated region
      $region25: #{down_forward.1} parent=23 // pred_check
        %p128 = pneg %p29
      $region26: #{down_forward.1} parent=23 // pred_check_branch
        %130 = sbr.rel (%p128) target = $region28
      $region27: #{down_forward.1} parent=23 // pred_region
        %p131 = scmp.lt.s32.totalorder %s9, 1
        %s132 = scalar_select %p131, %s9, 1
        %s133 = smul.addr %s132, 8
        %s134 = smul.addr %s133, 8
        %s135 = scalar_lea.vmem %s0, %s134
      $region28: #{down_forward.1} parent=23 // pred_fallthru
        _
    $region24: #{down_forward.1} parent=5 // pred_fallthru
      _
    %p136 = scmp.le.s32.totalorder 1, %s9
    %p137 = scmp.lt.s32.totalorder %s9, 3
    %p138 = pnand %p136, %p137
    %p139 = pneg %p138
    // Predicated region
    $region29: #{down_forward.1} parent=5 // pred_check
      _
    $region30: #{down_forward.1} parent=5 // pred_check_branch
      %141 = sbr.rel (%p138) target = $region32
    $region31: #{down_forward.1} parent=5 // pred_region
      %s142 = ssub.s32 %s9, 1
      %p143 = scmp.lt.s32.totalorder %s14, 1
      %s144 = scalar_select %p143, %s14, 1
      %s145 = smul.addr %s144, 8
      %s146 = smul.addr %s145, 8
      %s147 = scalar_lea.vmem %s0, %s146
      %p148 = pneg %p35
      %p149 = pneg %p32
      %p150 = pneg %p56
      %p151 = pneg %p53
      %p152 = pneg %p77
      %p153 = pneg %p74
      %p154 = pneg %p103
      %p155 = pneg %p100
      %p156 = scmp.lt.s32.totalorder %s14, 1
      %s157 = scalar_select %p156, %s14, 1
      %s158 = smul.addr %s157, 8
      %s159 = smul.addr %s158, 8
      %s160 = scalar_lea.vmem %s3, %s159
      %p161 = scmp.lt.s32.totalorder %s14, 1
      %s162 = scalar_select %p161, %s14, 1
      %s163 = smul.addr %s162, 8
      %s164 = smul.addr %s163, 8
      %s165 = scalar_lea.vmem %s0, %s164
      %p166 = scmp.lt.s32.totalorder %s14, 1
      %s167 = scalar_select %p166, %s14, 1
      %s168 = smul.addr %s167, 8
      %s169 = smul.addr %s168, 8
      %s170 = scalar_lea.vmem %s3, %s169
      %vm171 = vcmask 31744
      %172 = vst.msk [vmem:[#allocation2] sm:$0xff] %vm171, 0.0
      %vm173 = vcmask 25600
      %174 = vst.msk [vmem:[#allocation2 + $0x8] sm:$0x3] %vm173, 0.0
      %s175 = scalar_lea.vmem [#allocation2], 144
      %176 = vst.msk [vmem:[%s175] sm:$0xff] %vm171, 0.0
      %177 = vst.msk [vmem:[%s175 + $0x8] sm:$0x3] %vm173, 0.0
      %vm178 = vcmask 24576
      %179 = vst.msk [vmem:[#allocation2] sm:$0x1] %vm178, 0.0
      %180 = vst.msk [vmem:[#allocation2 + $0x10] sm:$0x1] %vm178, 0.0
      %181 = vst.msk [vmem:[#allocation2 + $0x20] sm:$0x1] %vm178, 0.0
      %182 = vst.msk [vmem:[#allocation2 + $0x30] sm:$0x1] %vm178, 0.0
      %183 = vst.msk [vmem:[#allocation2 + $0x40] sm:$0x1] %vm178, 0.0
      %184 = vst.msk [vmem:[#allocation2 + $0x50] sm:$0x1] %vm178, 0.0
      %185 = vst.msk [vmem:[#allocation2 + $0x60] sm:$0x1] %vm178, 0.0
      %186 = vst.msk [vmem:[#allocation2 + $0x70] sm:$0x1] %vm178, 0.0
      %187 = vst.msk [vmem:[#allocation2 + $0x80] sm:$0x1] %vm178, 0.0
      %188 = vst.msk [vmem:[#allocation2 + $0x90] sm:$0x1] %vm178, 0.0
      %189 = vst.msk [vmem:[#allocation2 + $0x9] sm:$0x1] %vm178, 0.0
      %190 = vst.msk [vmem:[#allocation2 + $0x19] sm:$0x1] %vm178, 0.0
      %191 = vst.msk [vmem:[#allocation2 + $0x29] sm:$0x1] %vm178, 0.0
      %192 = vst.msk [vmem:[#allocation2 + $0x39] sm:$0x1] %vm178, 0.0
      %193 = vst.msk [vmem:[#allocation2 + $0x49] sm:$0x1] %vm178, 0.0
      %194 = vst.msk [vmem:[#allocation2 + $0x59] sm:$0x1] %vm178, 0.0
      %195 = vst.msk [vmem:[#allocation2 + $0x69] sm:$0x1] %vm178, 0.0
      %196 = vst.msk [vmem:[#allocation2 + $0x79] sm:$0x1] %vm178, 0.0
      %197 = vst.msk [vmem:[#allocation2 + $0x89] sm:$0x1] %vm178, 0.0
      %198 = vst.msk [vmem:[#allocation2 + $0x99] sm:$0x1] %vm178, 0.0
      %199 = vst [vmem:[#allocation3] sm:$0xff] 0.0
      %200 = vst [vmem:[#allocation3 + $0x8] sm:$0x3] 0.0
      %s201 = scalar_lea.vmem [#allocation3], 144
      %202 = vst [vmem:[%s201] sm:$0xff] 0.0
      %203 = vst [vmem:[%s201 + $0x8] sm:$0x3] 0.0
      %204 = vst [vmem:[#allocation3] sm:$0x1] 0.0
      %205 = vst [vmem:[#allocation3 + $0x10] sm:$0x1] 0.0
      %206 = vst [vmem:[#allocation3 + $0x20] sm:$0x1] 0.0
      %207 = vst [vmem:[#allocation3 + $0x30] sm:$0x1] 0.0
      %208 = vst [vmem:[#allocation3 + $0x40] sm:$0x1] 0.0
      %209 = vst [vmem:[#allocation3 + $0x50] sm:$0x1] 0.0
      %210 = vst [vmem:[#allocation3 + $0x60] sm:$0x1] 0.0
      %211 = vst [vmem:[#allocation3 + $0x70] sm:$0x1] 0.0
      %212 = vst [vmem:[#allocation3 + $0x80] sm:$0x1] 0.0
      %213 = vst [vmem:[#allocation3 + $0x90] sm:$0x1] 0.0
      %214 = vst [vmem:[#allocation3 + $0x9] sm:$0x1] 0.0
      %215 = vst [vmem:[#allocation3 + $0x19] sm:$0x1] 0.0
      %216 = vst [vmem:[#allocation3 + $0x29] sm:$0x1] 0.0
      %217 = vst [vmem:[#allocation3 + $0x39] sm:$0x1] 0.0
      %218 = vst [vmem:[#allocation3 + $0x49] sm:$0x1] 0.0
      %219 = vst [vmem:[#allocation3 + $0x59] sm:$0x1] 0.0
      %220 = vst [vmem:[#allocation3 + $0x69] sm:$0x1] 0.0
      %221 = vst [vmem:[#allocation3 + $0x79] sm:$0x1] 0.0
      %222 = vst [vmem:[#allocation3 + $0x89] sm:$0x1] 0.0
      %223 = vst [vmem:[#allocation3 + $0x99] sm:$0x1] 0.0
      %v224 = vld [vmem:[%s165] sm:$0xff]
      %v225 = vld [vmem:[%s165 + $0x8] sm:$0xff]
      %v226 = vld [vmem:[%s165 + $0x10] sm:$0xff]
      %v227 = vld [vmem:[%s165 + $0x18] sm:$0xff]
      %v228 = vld [vmem:[%s165 + $0x20] sm:$0xff]
      %v229 = vld [vmem:[%s165 + $0x28] sm:$0xff]
      %v230 = vld [vmem:[%s165 + $0x30] sm:$0xff]
      %v231 = vld [vmem:[%s165 + $0x38] sm:$0xff]
      %s232 = scalar_lea.vmem [#allocation2], 16
      %233 = vst.msk [vmem:[%s232 + $0x1] sm:$0xff] %vm171, %v224
      %234 = vst.msk [vmem:[%s232 + $0x11] sm:$0xff] %vm171, %v225
      %235 = vst.msk [vmem:[%s232 + $0x21] sm:$0xff] %vm171, %v226
      %236 = vst.msk [vmem:[%s232 + $0x31] sm:$0xff] %vm171, %v227
      %237 = vst.msk [vmem:[%s232 + $0x41] sm:$0xff] %vm171, %v228
      %238 = vst.msk [vmem:[%s232 + $0x51] sm:$0xff] %vm171, %v229
      %239 = vst.msk [vmem:[%s232 + $0x61] sm:$0xff] %vm171, %v230
      %240 = vst.msk [vmem:[%s232 + $0x71] sm:$0xff] %vm171, %v231
      %v241 = vld [vmem:[#allocation2] sm:$0xff]
      %v242 = vld [vmem:[#allocation2 + $0x10] sm:$0xff]
      %v243 = vld [vmem:[#allocation2 + $0x20] sm:$0xff]
      %v244 = vld [vmem:[#allocation2 + $0x30] sm:$0xff]
      %v245 = vld [vmem:[#allocation2 + $0x40] sm:$0xff]
      %v246 = vld [vmem:[#allocation2 + $0x50] sm:$0xff]
      %v247 = vld [vmem:[#allocation2 + $0x60] sm:$0xff]
      %v248 = vld [vmem:[#allocation2 + $0x70] sm:$0xff]
      %249 = vst.msk [vmem:[#allocation4] sm:$0xff] %vm171, %v241
      %250 = vst.msk [vmem:[#allocation4 + $0x8] sm:$0xff] %vm171, %v242
      %251 = vst.msk [vmem:[#allocation4 + $0x10] sm:$0xff] %vm171, %v243
      %252 = vst.msk [vmem:[#allocation4 + $0x18] sm:$0xff] %vm171, %v244
      %253 = vst.msk [vmem:[#allocation4 + $0x20] sm:$0xff] %vm171, %v245
      %254 = vst.msk [vmem:[#allocation4 + $0x28] sm:$0xff] %vm171, %v246
      %255 = vst.msk [vmem:[#allocation4 + $0x30] sm:$0xff] %vm171, %v247
      %256 = vst.msk [vmem:[#allocation4 + $0x38] sm:$0xff] %vm171, %v248
      %v257 = vld [vmem:[#allocation2 + $0x1] sm:$0xff]
      %v258 = vld [vmem:[#allocation2 + $0x11] sm:$0xff]
      %v259 = vld [vmem:[#allocation2 + $0x21] sm:$0xff]
      %v260 = vld [vmem:[#allocation2 + $0x31] sm:$0xff]
      %v261 = vld [vmem:[#allocation2 + $0x41] sm:$0xff]
      %v262 = vld [vmem:[#allocation2 + $0x51] sm:$0xff]
      %v263 = vld [vmem:[#allocation2 + $0x61] sm:$0xff]
      %v264 = vld [vmem:[#allocation2 + $0x71] sm:$0xff]
      %273 = vrot.lane.b32.xlu0 %v257, 4
      %v274 = vpop.permute.xlu0 %273
      %275 = vrot.lane.b32.xlu0 %v258, 4
      %v276 = vpop.permute.xlu0 %275
      %277 = vrot.lane.b32.xlu0 %v259, 4
      %v278 = vpop.permute.xlu0 %277
      %279 = vrot.lane.b32.xlu0 %v260, 4
      %v280 = vpop.permute.xlu0 %279
      %281 = vrot.lane.b32.xlu0 %v261, 4
      %v282 = vpop.permute.xlu0 %281
      %283 = vrot.lane.b32.xlu0 %v262, 4
      %v284 = vpop.permute.xlu0 %283
      %285 = vrot.lane.b32.xlu0 %v263, 4
      %v286 = vpop.permute.xlu0 %285
      %287 = vrot.lane.b32.xlu0 %v264, 4
      %v288 = vpop.permute.xlu0 %287
      %vm297 = vcmask 64544
      %298 = vst.msk [vmem:[#allocation4] sm:$0xff] %vm297, %v274
      %299 = vst.msk [vmem:[#allocation4 + $0x8] sm:$0xff] %vm297, %v276
      %300 = vst.msk [vmem:[#allocation4 + $0x10] sm:$0xff] %vm297, %v278
      %301 = vst.msk [vmem:[#allocation4 + $0x18] sm:$0xff] %vm297, %v280
      %302 = vst.msk [vmem:[#allocation4 + $0x20] sm:$0xff] %vm297, %v282
      %303 = vst.msk [vmem:[#allocation4 + $0x28] sm:$0xff] %vm297, %v284
      %304 = vst.msk [vmem:[#allocation4 + $0x30] sm:$0xff] %vm297, %v286
      %305 = vst.msk [vmem:[#allocation4 + $0x38] sm:$0xff] %vm297, %v288
      %v306 = vld [vmem:[#allocation2 + $0x2] sm:$0xff]
      %v307 = vld [vmem:[#allocation2 + $0x12] sm:$0xff]
      %v308 = vld [vmem:[#allocation2 + $0x22] sm:$0xff]
      %v309 = vld [vmem:[#allocation2 + $0x32] sm:$0xff]
      %v310 = vld [vmem:[#allocation2 + $0x42] sm:$0xff]
      %v311 = vld [vmem:[#allocation2 + $0x52] sm:$0xff]
      %v312 = vld [vmem:[#allocation2 + $0x62] sm:$0xff]
      %v313 = vld [vmem:[#allocation2 + $0x72] sm:$0xff]
      %322 = vrot.lane.b32.xlu0 %v306, 8
      %v323 = vpop.permute.xlu0 %322
      %324 = vrot.lane.b32.xlu0 %v307, 8
      %v325 = vpop.permute.xlu0 %324
      %326 = vrot.lane.b32.xlu0 %v308, 8
      %v327 = vpop.permute.xlu0 %326
      %328 = vrot.lane.b32.xlu0 %v309, 8
      %v329 = vpop.permute.xlu0 %328
      %330 = vrot.lane.b32.xlu0 %v310, 8
      %v331 = vpop.permute.xlu0 %330
      %332 = vrot.lane.b32.xlu0 %v311, 8
      %v333 = vpop.permute.xlu0 %332
      %334 = vrot.lane.b32.xlu0 %v312, 8
      %v335 = vpop.permute.xlu0 %334
      %336 = vrot.lane.b32.xlu0 %v313, 8
      %v337 = vpop.permute.xlu0 %336
      %vm346 = vcmask 97344
      %347 = vst.msk [vmem:[#allocation4] sm:$0xff] %vm346, %v323
      %348 = vst.msk [vmem:[#allocation4 + $0x8] sm:$0xff] %vm346, %v325
      %349 = vst.msk [vmem:[#allocation4 + $0x10] sm:$0xff] %vm346, %v327
      %350 = vst.msk [vmem:[#allocation4 + $0x18] sm:$0xff] %vm346, %v329
      %351 = vst.msk [vmem:[#allocation4 + $0x20] sm:$0xff] %vm346, %v331
      %352 = vst.msk [vmem:[#allocation4 + $0x28] sm:$0xff] %vm346, %v333
      %353 = vst.msk [vmem:[#allocation4 + $0x30] sm:$0xff] %vm346, %v335
      %354 = vst.msk [vmem:[#allocation4 + $0x38] sm:$0xff] %vm346, %v337
      %v355 = vld [vmem:[%s232] sm:$0xff]
      %v356 = vld [vmem:[%s232 + $0x10] sm:$0xff]
      %v357 = vld [vmem:[%s232 + $0x20] sm:$0xff]
      %v358 = vld [vmem:[%s232 + $0x30] sm:$0xff]
      %v359 = vld [vmem:[%s232 + $0x40] sm:$0xff]
      %v360 = vld [vmem:[%s232 + $0x50] sm:$0xff]
      %v361 = vld [vmem:[%s232 + $0x60] sm:$0xff]
      %v362 = vld [vmem:[%s232 + $0x70] sm:$0xff]
      %371 = vrot.lane.b32.xlu0 %v355, 12
      %v372 = vpop.permute.xlu0 %371
      %373 = vrot.lane.b32.xlu0 %v356, 12
      %v374 = vpop.permute.xlu0 %373
      %375 = vrot.lane.b32.xlu0 %v357, 12
      %v376 = vpop.permute.xlu0 %375
      %377 = vrot.lane.b32.xlu0 %v358, 12
      %v378 = vpop.permute.xlu0 %377
      %379 = vrot.lane.b32.xlu0 %v359, 12
      %v380 = vpop.permute.xlu0 %379
      %381 = vrot.lane.b32.xlu0 %v360, 12
      %v382 = vpop.permute.xlu0 %381
      %383 = vrot.lane.b32.xlu0 %v361, 12
      %v384 = vpop.permute.xlu0 %383
      %385 = vrot.lane.b32.xlu0 %v362, 12
      %v386 = vpop.permute.xlu0 %385
      %vm395 = vcmask 130144
      %396 = vst.msk [vmem:[#allocation4] sm:$0xff] %vm395, %v372
      %397 = vst.msk [vmem:[#allocation4 + $0x8] sm:$0xff] %vm395, %v374
      %398 = vst.msk [vmem:[#allocation4 + $0x10] sm:$0xff] %vm395, %v376
      %399 = vst.msk [vmem:[#allocation4 + $0x18] sm:$0xff] %vm395, %v378
      %400 = vst.msk [vmem:[#allocation4 + $0x20] sm:$0xff] %vm395, %v380
      %401 = vst.msk [vmem:[#allocation4 + $0x28] sm:$0xff] %vm395, %v382
      %402 = vst.msk [vmem:[#allocation4 + $0x30] sm:$0xff] %vm395, %v384
      %403 = vst.msk [vmem:[#allocation4 + $0x38] sm:$0xff] %vm395, %v386
      %v404 = vld [vmem:[%s232 + $0x1] sm:$0xff]
      %v405 = vld [vmem:[%s232 + $0x11] sm:$0xff]
      %v406 = vld [vmem:[%s232 + $0x21] sm:$0xff]
      %v407 = vld [vmem:[%s232 + $0x31] sm:$0xff]
      %v408 = vld [vmem:[%s232 + $0x41] sm:$0xff]
      %v409 = vld [vmem:[%s232 + $0x51] sm:$0xff]
      %v410 = vld [vmem:[%s232 + $0x61] sm:$0xff]
      %v411 = vld [vmem:[%s232 + $0x71] sm:$0xff]
      %420 = vrot.lane.b32.xlu0 %v404, 16
      %v421 = vpop.permute.xlu0 %420
      %422 = vrot.lane.b32.xlu0 %v405, 16
      %v423 = vpop.permute.xlu0 %422
      %424 = vrot.lane.b32.xlu0 %v406, 16
      %v425 = vpop.permute.xlu0 %424
      %426 = vrot.lane.b32.xlu0 %v407, 16
      %v427 = vpop.permute.xlu0 %426
      %428 = vrot.lane.b32.xlu0 %v408, 16
      %v429 = vpop.permute.xlu0 %428
      %430 = vrot.lane.b32.xlu0 %v409, 16
      %v431 = vpop.permute.xlu0 %430
      %432 = vrot.lane.b32.xlu0 %v410, 16
      %v433 = vpop.permute.xlu0 %432
      %434 = vrot.lane.b32.xlu0 %v411, 16
      %v435 = vpop.permute.xlu0 %434
      %vm444 = vcmask 162944
      %445 = vst.msk [vmem:[#allocation4] sm:$0xff] %vm444, %v421
      %446 = vst.msk [vmem:[#allocation4 + $0x8] sm:$0xff] %vm444, %v423
      %447 = vst.msk [vmem:[#allocation4 + $0x10] sm:$0xff] %vm444, %v425
      %448 = vst.msk [vmem:[#allocation4 + $0x18] sm:$0xff] %vm444, %v427
      %449 = vst.msk [vmem:[#allocation4 + $0x20] sm:$0xff] %vm444, %v429
      %450 = vst.msk [vmem:[#allocation4 + $0x28] sm:$0xff] %vm444, %v431
      %451 = vst.msk [vmem:[#allocation4 + $0x30] sm:$0xff] %vm444, %v433
      %452 = vst.msk [vmem:[#allocation4 + $0x38] sm:$0xff] %vm444, %v435
      %v453 = vld [vmem:[%s232 + $0x2] sm:$0xff]
      %v454 = vld [vmem:[%s232 + $0x12] sm:$0xff]
      %v455 = vld [vmem:[%s232 + $0x22] sm:$0xff]
      %v456 = vld [vmem:[%s232 + $0x32] sm:$0xff]
      %v457 = vld [vmem:[%s232 + $0x42] sm:$0xff]
      %v458 = vld [vmem:[%s232 + $0x52] sm:$0xff]
      %v459 = vld [vmem:[%s232 + $0x62] sm:$0xff]
      %v460 = vld [vmem:[%s232 + $0x72] sm:$0xff]
      %469 = vrot.lane.b32.xlu0 %v453, 20
      %v470 = vpop.permute.xlu0 %469
      %471 = vrot.lane.b32.xlu0 %v454, 20
      %v472 = vpop.permute.xlu0 %471
      %473 = vrot.lane.b32.xlu0 %v455, 20
      %v474 = vpop.permute.xlu0 %473
      %475 = vrot.lane.b32.xlu0 %v456, 20
      %v476 = vpop.permute.xlu0 %475
      %477 = vrot.lane.b32.xlu0 %v457, 20
      %v478 = vpop.permute.xlu0 %477
      %479 = vrot.lane.b32.xlu0 %v458, 20
      %v480 = vpop.permute.xlu0 %479
      %481 = vrot.lane.b32.xlu0 %v459, 20
      %v482 = vpop.permute.xlu0 %481
      %483 = vrot.lane.b32.xlu0 %v460, 20
      %v484 = vpop.permute.xlu0 %483
      %vm493 = vcmask 195744
      %494 = vst.msk [vmem:[#allocation4] sm:$0xff] %vm493, %v470
      %495 = vst.msk [vmem:[#allocation4 + $0x8] sm:$0xff] %vm493, %v472
      %496 = vst.msk [vmem:[#allocation4 + $0x10] sm:$0xff] %vm493, %v474
      %497 = vst.msk [vmem:[#allocation4 + $0x18] sm:$0xff] %vm493, %v476
      %498 = vst.msk [vmem:[#allocation4 + $0x20] sm:$0xff] %vm493, %v478
      %499 = vst.msk [vmem:[#allocation4 + $0x28] sm:$0xff] %vm493, %v480
      %500 = vst.msk [vmem:[#allocation4 + $0x30] sm:$0xff] %vm493, %v482
      %501 = vst.msk [vmem:[#allocation4 + $0x38] sm:$0xff] %vm493, %v484
      %s502 = scalar_lea.vmem [#allocation2], 32
      %v503 = vld [vmem:[%s502] sm:$0xff]
      %v504 = vld [vmem:[%s502 + $0x10] sm:$0xff]
      %v505 = vld [vmem:[%s502 + $0x20] sm:$0xff]
      %v506 = vld [vmem:[%s502 + $0x30] sm:$0xff]
      %v507 = vld [vmem:[%s502 + $0x40] sm:$0xff]
      %v508 = vld [vmem:[%s502 + $0x50] sm:$0xff]
      %v509 = vld [vmem:[%s502 + $0x60] sm:$0xff]
      %v510 = vld [vmem:[%s502 + $0x70] sm:$0xff]
      %519 = vrot.lane.b32.xlu0 %v503, 24
      %v520 = vpop.permute.xlu0 %519
      %521 = vrot.lane.b32.xlu0 %v504, 24
      %v522 = vpop.permute.xlu0 %521
      %523 = vrot.lane.b32.xlu0 %v505, 24
      %v524 = vpop.permute.xlu0 %523
      %525 = vrot.lane.b32.xlu0 %v506, 24
      %v526 = vpop.permute.xlu0 %525
      %527 = vrot.lane.b32.xlu0 %v507, 24
      %v528 = vpop.permute.xlu0 %527
      %529 = vrot.lane.b32.xlu0 %v508, 24
      %v530 = vpop.permute.xlu0 %529
      %531 = vrot.lane.b32.xlu0 %v509, 24
      %v532 = vpop.permute.xlu0 %531
      %533 = vrot.lane.b32.xlu0 %v510, 24
      %v534 = vpop.permute.xlu0 %533
      %vm543 = vcmask 228544
      %544 = vst.msk [vmem:[#allocation4] sm:$0xff] %vm543, %v520
      %545 = vst.msk [vmem:[#allocation4 + $0x8] sm:$0xff] %vm543, %v522
      %546 = vst.msk [vmem:[#allocation4 + $0x10] sm:$0xff] %vm543, %v524
      %547 = vst.msk [vmem:[#allocation4 + $0x18] sm:$0xff] %vm543, %v526
      %548 = vst.msk [vmem:[#allocation4 + $0x20] sm:$0xff] %vm543, %v528
      %549 = vst.msk [vmem:[#allocation4 + $0x28] sm:$0xff] %vm543, %v530
      %550 = vst.msk [vmem:[#allocation4 + $0x30] sm:$0xff] %vm543, %v532
      %551 = vst.msk [vmem:[#allocation4 + $0x38] sm:$0xff] %vm543, %v534
      %v552 = vld [vmem:[%s502 + $0x1] sm:$0xff]
      %v553 = vld [vmem:[%s502 + $0x11] sm:$0xff]
      %v554 = vld [vmem:[%s502 + $0x21] sm:$0xff]
      %v555 = vld [vmem:[%s502 + $0x31] sm:$0xff]
      %v556 = vld [vmem:[%s502 + $0x41] sm:$0xff]
      %v557 = vld [vmem:[%s502 + $0x51] sm:$0xff]
      %v558 = vld [vmem:[%s502 + $0x61] sm:$0xff]
      %v559 = vld [vmem:[%s502 + $0x71] sm:$0xff]
      %568 = vrot.lane.b32.xlu0 %v552, 28
      %v569 = vpop.permute.xlu0 %568
      %570 = vrot.lane.b32.xlu0 %v553, 28
      %v571 = vpop.permute.xlu0 %570
      %572 = vrot.lane.b32.xlu0 %v554, 28
      %v573 = vpop.permute.xlu0 %572
      %574 = vrot.lane.b32.xlu0 %v555, 28
      %v575 = vpop.permute.xlu0 %574
      %576 = vrot.lane.b32.xlu0 %v556, 28
      %v577 = vpop.permute.xlu0 %576
      %578 = vrot.lane.b32.xlu0 %v557, 28
      %v579 = vpop.permute.xlu0 %578
      %580 = vrot.lane.b32.xlu0 %v558, 28
      %v581 = vpop.permute.xlu0 %580
      %582 = vrot.lane.b32.xlu0 %v559, 28
      %v583 = vpop.permute.xlu0 %582
      %vm592 = vcmask 261344
      %593 = vst.msk [vmem:[#allocation4] sm:$0xff] %vm592, %v569
      %594 = vst.msk [vmem:[#allocation4 + $0x8] sm:$0xff] %vm592, %v571
      %595 = vst.msk [vmem:[#allocation4 + $0x10] sm:$0xff] %vm592, %v573
      %596 = vst.msk [vmem:[#allocation4 + $0x18] sm:$0xff] %vm592, %v575
      %597 = vst.msk [vmem:[#allocation4 + $0x20] sm:$0xff] %vm592, %v577
      %598 = vst.msk [vmem:[#allocation4 + $0x28] sm:$0xff] %vm592, %v579
      %599 = vst.msk [vmem:[#allocation4 + $0x30] sm:$0xff] %vm592, %v581
      %600 = vst.msk [vmem:[#allocation4 + $0x38] sm:$0xff] %vm592, %v583
      %v601 = vld [vmem:[%s502 + $0x2] sm:$0xff]
      %v602 = vld [vmem:[%s502 + $0x12] sm:$0xff]
      %v603 = vld [vmem:[%s502 + $0x22] sm:$0xff]
      %v604 = vld [vmem:[%s502 + $0x32] sm:$0xff]
      %v605 = vld [vmem:[%s502 + $0x42] sm:$0xff]
      %v606 = vld [vmem:[%s502 + $0x52] sm:$0xff]
      %v607 = vld [vmem:[%s502 + $0x62] sm:$0xff]
      %v608 = vld [vmem:[%s502 + $0x72] sm:$0xff]
      %617 = vrot.lane.b32.xlu0 %v601, 32
      %v618 = vpop.permute.xlu0 %617
      %619 = vrot.lane.b32.xlu0 %v602, 32
      %v620 = vpop.permute.xlu0 %619
      %621 = vrot.lane.b32.xlu0 %v603, 32
      %v622 = vpop.permute.xlu0 %621
      %623 = vrot.lane.b32.xlu0 %v604, 32
      %v624 = vpop.permute.xlu0 %623
      %625 = vrot.lane.b32.xlu0 %v605, 32
      %v626 = vpop.permute.xlu0 %625
      %627 = vrot.lane.b32.xlu0 %v606, 32
      %v628 = vpop.permute.xlu0 %627
      %629 = vrot.lane.b32.xlu0 %v607, 32
      %v630 = vpop.permute.xlu0 %629
      %631 = vrot.lane.b32.xlu0 %v608, 32
      %v632 = vpop.permute.xlu0 %631
      %vm641 = vcmask 294144
      %642 = vst.msk [vmem:[#allocation4] sm:$0xff] %vm641, %v618
      %643 = vst.msk [vmem:[#allocation4 + $0x8] sm:$0xff] %vm641, %v620
      %644 = vst.msk [vmem:[#allocation4 + $0x10] sm:$0xff] %vm641, %v622
      %645 = vst.msk [vmem:[#allocation4 + $0x18] sm:$0xff] %vm641, %v624
      %646 = vst.msk [vmem:[#allocation4 + $0x20] sm:$0xff] %vm641, %v626
      %647 = vst.msk [vmem:[#allocation4 + $0x28] sm:$0xff] %vm641, %v628
      %648 = vst.msk [vmem:[#allocation4 + $0x30] sm:$0xff] %vm641, %v630
      %649 = vst.msk [vmem:[#allocation4 + $0x38] sm:$0xff] %vm641, %v632
      %v650 = vld [vmem:[#allocation4] sm:$0xff]
      %v651 = vld [vmem:[#allocation4 + $0x8] sm:$0xff]
      %v652 = vld [vmem:[#allocation4 + $0x10] sm:$0xff]
      %v653 = vld [vmem:[#allocation4 + $0x18] sm:$0xff]
      %v654 = vld [vmem:[#allocation4 + $0x20] sm:$0xff]
      %v655 = vld [vmem:[#allocation4 + $0x28] sm:$0xff]
      %v656 = vld [vmem:[#allocation4 + $0x30] sm:$0xff]
      %v657 = vld [vmem:[#allocation4 + $0x38] sm:$0xff]
      %v658 = vld [vmem:[%s1] sm:$0xff]
      %v659 = vld [vmem:[%s1 + $0x8] sm:$0xff]
      %v660 = vld [vmem:[%s1 + $0x10] sm:$0xff]
      %v661 = vld [vmem:[%s1 + $0x18] sm:$0xff]
      %v662 = vld [vmem:[%s1 + $0x20] sm:$0xf]
      %vm663 = vcmask 293888
      %v665 = vsel %vm663, %v650, 0
      %v668 = vsel %vm663, %v651, 0
      %v671 = vsel %vm663, %v652, 0
      %v674 = vsel %vm663, %v653, 0
      %v677 = vsel %vm663, %v654, 0
      %v680 = vsel %vm663, %v655, 0
      %v683 = vsel %vm663, %v656, 0
      %v686 = vsel %vm663, %v657, 0
      %vm688 = vcmask 1043456
      %v690 = vsel %vm688, %v662, 0
      %692 = vmatprep.subr.mxu0 0.0
      %693 = vmatpush1.msra.mxu0 0.0
      %694 = vmatprep.subr.mxu0 0.0
      %695 = vmatpush1.msra.mxu0 0.0
      %696 = vmatprep.subr.mxu0 0.0
      %697 = vmatpush1.msra.mxu0 0.0
      %698 = vmatprep.subr.mxu0 0.0
      %699 = vmatpush1.msra.mxu0 0.0
      %700 = vmatprep.subr.mxu0 0.0
      %701 = vmatpush1.msra.mxu0 0.0
      %702 = vmatprep.subr.mxu0 0.0
      %703 = vmatpush1.msra.mxu0 0.0
      %704 = vmatprep.subr.mxu0 0.0
      %705 = vmatpush1.msra.mxu0 0.0
      %706 = vmatprep.subr.mxu0 0.0
      %707 = vmatpush1.msra.mxu0 0.0
      %708 = vmatprep.subr.mxu0 0.0
      %709 = vmatpush1.msra.mxu0 0.0
      %710 = vmatprep.subr.mxu0 0.0
      %711 = vmatpush1.msra.mxu0 0.0
      %712 = vmatprep.subr.mxu0 0.0
      %713 = vmatpush1.msra.mxu0 0.0
      %714 = vmatprep.subr.mxu0 0.0
      %715 = vmatpush1.msra.mxu0 %v690
      %716 = vmatprep.subr.mxu0 0.0
      %717 = vmatpush1.msra.mxu0 %v661
      %718 = vmatprep.subr.mxu0 0.0
      %719 = vmatpush1.msra.mxu0 %v660
      %720 = vmatprep.subr.mxu0 0.0
      %721 = vmatpush1.msra.mxu0 %v659
      %722 = vmatprep.subr.mxu0 0.0
      %723 = vmatpush1.msra.mxu0 %v658
      %724 = vmatprep.subr.mxu0 0.0
      %725 = vmatpush2.msra.mxu0 0.0
      %726 = vmatprep.subr.mxu0 0.0
      %727 = vmatpush2.msra.mxu0 0.0
      %728 = vmatprep.subr.mxu0 0.0
      %729 = vmatpush2.msra.mxu0 0.0
      %730 = vmatprep.subr.mxu0 0.0
      %731 = vmatpush2.msra.mxu0 0.0
      %732 = vmatprep.subr.mxu0 0.0
      %733 = vmatpush2.msra.mxu0 0.0
      %734 = vmatprep.subr.mxu0 0.0
      %735 = vmatpush2.msra.mxu0 0.0
      %736 = vmatprep.subr.mxu0 0.0
      %737 = vmatpush2.msra.mxu0 0.0
      %738 = vmatprep.subr.mxu0 0.0
      %739 = vmatpush2.msra.mxu0 0.0
      %740 = vmatprep.subr.mxu0 0.0
      %741 = vmatpush2.msra.mxu0 0.0
      %742 = vmatprep.subr.mxu0 0.0
      %743 = vmatpush2.msra.mxu0 0.0
      %744 = vmatprep.subr.mxu0 0.0
      %745 = vmatpush2.msra.mxu0 0.0
      %746 = vmatprep.subr.mxu0 0.0
      %747 = vmatpush2.msra.mxu0 0.0
      %748 = vmatprep.subr.mxu0 0.0
      %749 = vmatpush2.msra.mxu0 0.0
      %750 = vmatprep.subr.mxu0 0.0
      %751 = vmatpush2.msra.mxu0 0.0
      %752 = vmatprep.subr.mxu0 0.0
      %753 = vmatpush2.msra.mxu0 0.0
      %754 = vmatprep.subr.mxu0 0.0
      %755 = vmatpush2.msra.mxu0 0.0
      %756 = vmatprep.mubr.f32.mxu0 0.0
      %757 = vmatmul.mubr.f32.gmra.mxu0 %v665
      %v758 = vpop.f32.mrf.mxu0
      %v759 = vadd.f32 0.0, %v758
      %v760 = vpop.f32.mrf.mxu0
      %761 = vmatprep.mubr.f32.mxu0 0.0
      %762 = vmatmul.mubr.f32.gmra.mxu0 %v668
      %v763 = vpop.f32.mrf.mxu0
      %v764 = vadd.f32 0.0, %v763
      %v765 = vpop.f32.mrf.mxu0
      %766 = vmatprep.mubr.f32.mxu0 0.0
      %767 = vmatmul.mubr.f32.gmra.mxu0 %v671
      %v768 = vpop.f32.mrf.mxu0
      %v769 = vadd.f32 0.0, %v768
      %v770 = vpop.f32.mrf.mxu0
      %771 = vmatprep.mubr.f32.mxu0 0.0
      %772 = vmatmul.mubr.f32.gmra.mxu0 %v674
      %v773 = vpop.f32.mrf.mxu0
      %v774 = vadd.f32 0.0, %v773
      %v775 = vpop.f32.mrf.mxu0
      %776 = vmatprep.mubr.f32.mxu0 0.0
      %777 = vmatmul.mubr.f32.gmra.mxu0 %v677
      %v778 = vpop.f32.mrf.mxu0
      %v779 = vadd.f32 0.0, %v778
      %v780 = vpop.f32.mrf.mxu0
      %781 = vmatprep.mubr.f32.mxu0 0.0
      %782 = vmatmul.mubr.f32.gmra.mxu0 %v680
      %v783 = vpop.f32.mrf.mxu0
      %v784 = vadd.f32 0.0, %v783
      %v785 = vpop.f32.mrf.mxu0
      %786 = vmatprep.mubr.f32.mxu0 0.0
      %787 = vmatmul.mubr.f32.gmra.mxu0 %v683
      %v788 = vpop.f32.mrf.mxu0
      %v789 = vadd.f32 0.0, %v788
      %v790 = vpop.f32.mrf.mxu0
      %791 = vmatprep.mubr.f32.mxu0 0.0
      %792 = vmatmul.mubr.f32.gmra.mxu0 %v686
      %v793 = vpop.f32.mrf.mxu0
      %v794 = vadd.f32 0.0, %v793
      %v795 = vpop.f32.mrf.mxu0
      %796 = vdwg.mxu0
      %v797 = vadd.f32 %v759, %v764
      %v798 = vadd.f32 %v797, %v769
      %v799 = vadd.f32 %v798, %v774
      %v800 = vadd.f32 %v799, %v779
      %v801 = vadd.f32 %v800, %v784
      %v802 = vadd.f32 %v801, %v789
      %v803 = vadd.f32 %v802, %v794
      %v804 = vrot.slane %v803, 4
      %v805 = vadd.f32 %v803, %v804
      %v806 = vrot.slane %v805, 2
      %v807 = vadd.f32 %v805, %v806
      %v808 = vrot.slane %v807, 1
      %v809 = vadd.f32 %v807, %v808
      %v810 = vrcp.pop 64.0
      %v811 = vmul.f32 %v809, %v810
      %v812 = vmul.f32 %v759, %v759
      %v813 = vmul.f32 %v764, %v764
      %v814 = vmul.f32 %v769, %v769
      %v815 = vmul.f32 %v774, %v774
      %v816 = vmul.f32 %v779, %v779
      %v817 = vmul.f32 %v784, %v784
      %v818 = vmul.f32 %v789, %v789
      %v819 = vmul.f32 %v794, %v794
      %v820 = vadd.f32 %v812, %v813
      %v821 = vadd.f32 %v820, %v814
      %v822 = vadd.f32 %v821, %v815
      %v823 = vadd.f32 %v822, %v816
      %v824 = vadd.f32 %v823, %v817
      %v825 = vadd.f32 %v824, %v818
      %v826 = vadd.f32 %v825, %v819
      %v827 = vrot.slane %v826, 4
      %v828 = vadd.f32 %v826, %v827
      %v829 = vrot.slane %v828, 2
      %v830 = vadd.f32 %v828, %v829
      %v831 = vrot.slane %v830, 1
      %v832 = vadd.f32 %v830, %v831
      %v833 = vmul.f32 %v832, %v810
      %v834 = vmul.f32 %v811, %v811
      %v835 = vsub.f32 %v833, %v834
      %v836 = vmax.f32 %v835, 0.0
      %v837 = vsub.f32 %v759, %v811
      %v838 = vsub.f32 %v764, %v811
      %v839 = vsub.f32 %v769, %v811
      %v840 = vsub.f32 %v774, %v811
      %v841 = vsub.f32 %v779, %v811
      %v842 = vsub.f32 %v784, %v811
      %v843 = vsub.f32 %v789, %v811
      %v844 = vsub.f32 %v794, %v811
      %v845 = vadd.f32 %v836, 1e-05
      %v846 = vrsqrt.pop %v845
      %v847 = vmul.f32 %v837, %v846
      %v848 = vmul.f32 %v838, %v846
      %v849 = vmul.f32 %v839, %v846
      %v850 = vmul.f32 %v840, %v846
      %v851 = vmul.f32 %v841, %v846
      %v852 = vmul.f32 %v842, %v846
      %v853 = vmul.f32 %v843, %v846
      %v854 = vmul.f32 %v844, %v846
      %v855 = vmul.f32 %v847, 0.2
      %v856 = vmul.f32 %v848, 0.2
      %v857 = vmul.f32 %v849, 0.2
      %v858 = vmul.f32 %v850, 0.2
      %v859 = vmul.f32 %v851, 0.2
      %v860 = vmul.f32 %v852, 0.2
      %v861 = vmul.f32 %v853, 0.2
      %v862 = vmul.f32 %v854, 0.2
      %v863 = vmax.f32 %v847, %v855
      %v864 = vmax.f32 %v848, %v856
      %v865 = vmax.f32 %v849, %v857
      %v866 = vmax.f32 %v850, %v858
      %v867 = vmax.f32 %v851, %v859
      %v868 = vmax.f32 %v852, %v860
      %v869 = vmax.f32 %v853, %v861
      %v870 = vmax.f32 %v854, %v862
      %s871 = scalar_lea.vmem [#allocation3], 16
      %872 = vst [vmem:[%s871 + $0x1] sm:$0xff] %v863
      %873 = vst [vmem:[%s871 + $0x11] sm:$0xff] %v864
      %874 = vst [vmem:[%s871 + $0x21] sm:$0xff] %v865
      %875 = vst [vmem:[%s871 + $0x31] sm:$0xff] %v866
      %876 = vst [vmem:[%s871 + $0x41] sm:$0xff] %v867
      %877 = vst [vmem:[%s871 + $0x51] sm:$0xff] %v868
      %878 = vst [vmem:[%s871 + $0x61] sm:$0xff] %v869
      %879 = vst [vmem:[%s871 + $0x71] sm:$0xff] %v870
      %v880 = vld [vmem:[#allocation3] sm:$0xff]
      %v881 = vld [vmem:[#allocation3 + $0x10] sm:$0xff]
      %v882 = vld [vmem:[#allocation3 + $0x20] sm:$0xff]
      %v883 = vld [vmem:[#allocation3 + $0x30] sm:$0xff]
      %v884 = vld [vmem:[#allocation3 + $0x40] sm:$0xff]
      %v885 = vld [vmem:[#allocation3 + $0x50] sm:$0xff]
      %v886 = vld [vmem:[#allocation3 + $0x60] sm:$0xff]
      %v887 = vld [vmem:[#allocation3 + $0x70] sm:$0xff]
      %888 = vst [vmem:[#allocation5] sm:$0xff] %v880
      %889 = vst [vmem:[#allocation5 + $0x48] sm:$0xff] %v881
      %890 = vst [vmem:[#allocation5 + $0x90] sm:$0xff] %v882
      %891 = vst [vmem:[#allocation5 + $0xd8] sm:$0xff] %v883
      %892 = vst [vmem:[#allocation5 + $0x120] sm:$0xff] %v884
      %893 = vst [vmem:[#allocation5 + $0x168] sm:$0xff] %v885
      %894 = vst [vmem:[#allocation5 + $0x1b0] sm:$0xff] %v886
      %895 = vst [vmem:[#allocation5 + $0x1f8] sm:$0xff] %v887
      %v896 = vld [vmem:[#allocation3 + $0x1] sm:$0xff]
      %v897 = vld [vmem:[#allocation3 + $0x11] sm:$0xff]
      %v898 = vld [vmem:[#allocation3 + $0x21] sm:$0xff]
      %v899 = vld [vmem:[#allocation3 + $0x31] sm:$0xff]
      %v900 = vld [vmem:[#allocation3 + $0x41] sm:$0xff]
      %v901 = vld [vmem:[#allocation3 + $0x51] sm:$0xff]
      %v902 = vld [vmem:[#allocation3 + $0x61] sm:$0xff]
      %v903 = vld [vmem:[#allocation3 + $0x71] sm:$0xff]
      %904 = vst [vmem:[#allocation5 + $0x8] sm:$0xff] %v896
      %905 = vst [vmem:[#allocation5 + $0x50] sm:$0xff] %v897
      %906 = vst [vmem:[#allocation5 + $0x98] sm:$0xff] %v898
      %907 = vst [vmem:[#allocation5 + $0xe0] sm:$0xff] %v899
      %908 = vst [vmem:[#allocation5 + $0x128] sm:$0xff] %v900
      %909 = vst [vmem:[#allocation5 + $0x170] sm:$0xff] %v901
      %910 = vst [vmem:[#allocation5 + $0x1b8] sm:$0xff] %v902
      %911 = vst [vmem:[#allocation5 + $0x200] sm:$0xff] %v903
      %v912 = vld [vmem:[#allocation3 + $0x2] sm:$0xff]
      %v913 = vld [vmem:[#allocation3 + $0x12] sm:$0xff]
      %v914 = vld [vmem:[#allocation3 + $0x22] sm:$0xff]
      %v915 = vld [vmem:[#allocation3 + $0x32] sm:$0xff]
      %v916 = vld [vmem:[#allocation3 + $0x42] sm:$0xff]
      %v917 = vld [vmem:[#allocation3 + $0x52] sm:$0xff]
      %v918 = vld [vmem:[#allocation3 + $0x62] sm:$0xff]
      %v919 = vld [vmem:[#allocation3 + $0x72] sm:$0xff]
      %920 = vst [vmem:[#allocation5 + $0x10] sm:$0xff] %v912
      %921 = vst [vmem:[#allocation5 + $0x58] sm:$0xff] %v913
      %922 = vst [vmem:[#allocation5 + $0xa0] sm:$0xff] %v914
      %923 = vst [vmem:[#allocation5 + $0xe8] sm:$0xff] %v915
      %924 = vst [vmem:[#allocation5 + $0x130] sm:$0xff] %v916
      %925 = vst [vmem:[#allocation5 + $0x178] sm:$0xff] %v917
      %926 = vst [vmem:[#allocation5 + $0x1c0] sm:$0xff] %v918
      %927 = vst [vmem:[#allocation5 + $0x208] sm:$0xff] %v919
      %v928 = vld [vmem:[%s871] sm:$0xff]
      %v929 = vld [vmem:[%s871 + $0x10] sm:$0xff]
      %v930 = vld [vmem:[%s871 + $0x20] sm:$0xff]
      %v931 = vld [vmem:[%s871 + $0x30] sm:$0xff]
      %v932 = vld [vmem:[%s871 + $0x40] sm:$0xff]
      %v933 = vld [vmem:[%s871 + $0x50] sm:$0xff]
      %v934 = vld [vmem:[%s871 + $0x60] sm:$0xff]
      %v935 = vld [vmem:[%s871 + $0x70] sm:$0xff]
      %936 = vst [vmem:[#allocation5 + $0x18] sm:$0xff] %v928
      %937 = vst [vmem:[#allocation5 + $0x60] sm:$0xff] %v929
      %938 = vst [vmem:[#allocation5 + $0xa8] sm:$0xff] %v930
      %939 = vst [vmem:[#allocation5 + $0xf0] sm:$0xff] %v931
      %940 = vst [vmem:[#allocation5 + $0x138] sm:$0xff] %v932
      %941 = vst [vmem:[#allocation5 + $0x180] sm:$0xff] %v933
      %942 = vst [vmem:[#allocation5 + $0x1c8] sm:$0xff] %v934
      %943 = vst [vmem:[#allocation5 + $0x210] sm:$0xff] %v935
      %v944 = vld [vmem:[%s871 + $0x1] sm:$0xff]
      %v945 = vld [vmem:[%s871 + $0x11] sm:$0xff]
      %v946 = vld [vmem:[%s871 + $0x21] sm:$0xff]
      %v947 = vld [vmem:[%s871 + $0x31] sm:$0xff]
      %v948 = vld [vmem:[%s871 + $0x41] sm:$0xff]
      %v949 = vld [vmem:[%s871 + $0x51] sm:$0xff]
      %v950 = vld [vmem:[%s871 + $0x61] sm:$0xff]
      %v951 = vld [vmem:[%s871 + $0x71] sm:$0xff]
      %952 = vst [vmem:[#allocation5 + $0x20] sm:$0xff] %v944
      %953 = vst [vmem:[#allocation5 + $0x68] sm:$0xff] %v945
      %954 = vst [vmem:[#allocation5 + $0xb0] sm:$0xff] %v946
      %955 = vst [vmem:[#allocation5 + $0xf8] sm:$0xff] %v947
      %956 = vst [vmem:[#allocation5 + $0x140] sm:$0xff] %v948
      %957 = vst [vmem:[#allocation5 + $0x188] sm:$0xff] %v949
      %958 = vst [vmem:[#allocation5 + $0x1d0] sm:$0xff] %v950
      %959 = vst [vmem:[#allocation5 + $0x218] sm:$0xff] %v951
      %v960 = vld [vmem:[%s871 + $0x2] sm:$0xff]
      %v961 = vld [vmem:[%s871 + $0x12] sm:$0xff]
      %v962 = vld [vmem:[%s871 + $0x22] sm:$0xff]
      %v963 = vld [vmem:[%s871 + $0x32] sm:$0xff]
      %v964 = vld [vmem:[%s871 + $0x42] sm:$0xff]
      %v965 = vld [vmem:[%s871 + $0x52] sm:$0xff]
      %v966 = vld [vmem:[%s871 + $0x62] sm:$0xff]
      %v967 = vld [vmem:[%s871 + $0x72] sm:$0xff]
      %968 = vst [vmem:[#allocation5 + $0x28] sm:$0xff] %v960
      %969 = vst [vmem:[#allocation5 + $0x70] sm:$0xff] %v961
      %970 = vst [vmem:[#allocation5 + $0xb8] sm:$0xff] %v962
      %971 = vst [vmem:[#allocation5 + $0x100] sm:$0xff] %v963
      %972 = vst [vmem:[#allocation5 + $0x148] sm:$0xff] %v964
      %973 = vst [vmem:[#allocation5 + $0x190] sm:$0xff] %v965
      %974 = vst [vmem:[#allocation5 + $0x1d8] sm:$0xff] %v966
      %975 = vst [vmem:[#allocation5 + $0x220] sm:$0xff] %v967
      %s976 = scalar_lea.vmem [#allocation3], 32
      %v977 = vld [vmem:[%s976] sm:$0xff]
      %v978 = vld [vmem:[%s976 + $0x10] sm:$0xff]
      %v979 = vld [vmem:[%s976 + $0x20] sm:$0xff]
      %v980 = vld [vmem:[%s976 + $0x30] sm:$0xff]
      %v981 = vld [vmem:[%s976 + $0x40] sm:$0xff]
      %v982 = vld [vmem:[%s976 + $0x50] sm:$0xff]
      %v983 = vld [vmem:[%s976 + $0x60] sm:$0xff]
      %v984 = vld [vmem:[%s976 + $0x70] sm:$0xff]
      %985 = vst [vmem:[#allocation5 + $0x30] sm:$0xff] %v977
      %986 = vst [vmem:[#allocation5 + $0x78] sm:$0xff] %v978
      %987 = vst [vmem:[#allocation5 + $0xc0] sm:$0xff] %v979
      %988 = vst [vmem:[#allocation5 + $0x108] sm:$0xff] %v980
      %989 = vst [vmem:[#allocation5 + $0x150] sm:$0xff] %v981
      %990 = vst [vmem:[#allocation5 + $0x198] sm:$0xff] %v982
      %991 = vst [vmem:[#allocation5 + $0x1e0] sm:$0xff] %v983
      %992 = vst [vmem:[#allocation5 + $0x228] sm:$0xff] %v984
      %v993 = vld [vmem:[%s976 + $0x1] sm:$0xff]
      %v994 = vld [vmem:[%s976 + $0x11] sm:$0xff]
      %v995 = vld [vmem:[%s976 + $0x21] sm:$0xff]
      %v996 = vld [vmem:[%s976 + $0x31] sm:$0xff]
      %v997 = vld [vmem:[%s976 + $0x41] sm:$0xff]
      %v998 = vld [vmem:[%s976 + $0x51] sm:$0xff]
      %v999 = vld [vmem:[%s976 + $0x61] sm:$0xff]
      %v1000 = vld [vmem:[%s976 + $0x71] sm:$0xff]
      %1001 = vst [vmem:[#allocation5 + $0x38] sm:$0xff] %v993
      %1002 = vst [vmem:[#allocation5 + $0x80] sm:$0xff] %v994
      %1003 = vst [vmem:[#allocation5 + $0xc8] sm:$0xff] %v995
      %1004 = vst [vmem:[#allocation5 + $0x110] sm:$0xff] %v996
      %1005 = vst [vmem:[#allocation5 + $0x158] sm:$0xff] %v997
      %1006 = vst [vmem:[#allocation5 + $0x1a0] sm:$0xff] %v998
      %1007 = vst [vmem:[#allocation5 + $0x1e8] sm:$0xff] %v999
      %1008 = vst [vmem:[#allocation5 + $0x230] sm:$0xff] %v1000
      %v1009 = vld [vmem:[%s976 + $0x2] sm:$0xff]
      %v1010 = vld [vmem:[%s976 + $0x12] sm:$0xff]
      %v1011 = vld [vmem:[%s976 + $0x22] sm:$0xff]
      %v1012 = vld [vmem:[%s976 + $0x32] sm:$0xff]
      %v1013 = vld [vmem:[%s976 + $0x42] sm:$0xff]
      %v1014 = vld [vmem:[%s976 + $0x52] sm:$0xff]
      %v1015 = vld [vmem:[%s976 + $0x62] sm:$0xff]
      %v1016 = vld [vmem:[%s976 + $0x72] sm:$0xff]
      %1017 = vst [vmem:[#allocation5 + $0x40] sm:$0xff] %v1009
      %1018 = vst [vmem:[#allocation5 + $0x88] sm:$0xff] %v1010
      %1019 = vst [vmem:[#allocation5 + $0xd0] sm:$0xff] %v1011
      %1020 = vst [vmem:[#allocation5 + $0x118] sm:$0xff] %v1012
      %1021 = vst [vmem:[#allocation5 + $0x160] sm:$0xff] %v1013
      %1022 = vst [vmem:[#allocation5 + $0x1a8] sm:$0xff] %v1014
      %1023 = vst [vmem:[#allocation5 + $0x1f0] sm:$0xff] %v1015
      %1024 = vst [vmem:[#allocation5 + $0x238] sm:$0xff] %v1016
      %v1025 = vld [vmem:[#allocation5] sm:$0xff]
      %v1026 = vld [vmem:[#allocation5 + $0x8] sm:$0xff]
      %v1027 = vld [vmem:[#allocation5 + $0x10] sm:$0xff]
      %v1028 = vld [vmem:[#allocation5 + $0x18] sm:$0xff]
      %v1029 = vld [vmem:[#allocation5 + $0x20] sm:$0xff]
      %v1030 = vld [vmem:[#allocation5 + $0x28] sm:$0xff]
      %v1031 = vld [vmem:[#allocation5 + $0x30] sm:$0xff]
      %v1032 = vld [vmem:[#allocation5 + $0x38] sm:$0xff]
      %v1033 = vld [vmem:[#allocation5 + $0x40] sm:$0xff]
      %v1034 = vld [vmem:[#allocation5 + $0x48] sm:$0xff]
      %v1035 = vld [vmem:[#allocation5 + $0x50] sm:$0xff]
      %v1036 = vld [vmem:[#allocation5 + $0x58] sm:$0xff]
      %v1037 = vld [vmem:[#allocation5 + $0x60] sm:$0xff]
      %v1038 = vld [vmem:[#allocation5 + $0x68] sm:$0xff]
      %v1039 = vld [vmem:[#allocation5 + $0x70] sm:$0xff]
      %v1040 = vld [vmem:[#allocation5 + $0x78] sm:$0xff]
      %v1041 = vld [vmem:[#allocation5 + $0x80] sm:$0xff]
      %v1042 = vld [vmem:[#allocation5 + $0x88] sm:$0xff]
      %v1043 = vld [vmem:[#allocation5 + $0x90] sm:$0xff]
      %v1044 = vld [vmem:[#allocation5 + $0x98] sm:$0xff]
      %v1045 = vld [vmem:[#allocation5 + $0xa0] sm:$0xff]
      %v1046 = vld [vmem:[#allocation5 + $0xa8] sm:$0xff]
      %v1047 = vld [vmem:[#allocation5 + $0xb0] sm:$0xff]
      %v1048 = vld [vmem:[#allocation5 + $0xb8] sm:$0xff]
      %v1049 = vld [vmem:[#allocation5 + $0xc0] sm:$0xff]
      %v1050 = vld [vmem:[#allocation5 + $0xc8] sm:$0xff]
      %v1051 = vld [vmem:[#allocation5 + $0xd0] sm:$0xff]
      %v1052 = vld [vmem:[#allocation5 + $0xd8] sm:$0xff]
      %v1053 = vld [vmem:[#allocation5 + $0xe0] sm:$0xff]
      %v1054 = vld [vmem:[#allocation5 + $0xe8] sm:$0xff]
      %v1055 = vld [vmem:[#allocation5 + $0xf0] sm:$0xff]
      %v1056 = vld [vmem:[#allocation5 + $0xf8] sm:$0xff]
      %v1057 = vld [vmem:[#allocation5 + $0x100] sm:$0xff]
      %v1058 = vld [vmem:[#allocation5 + $0x108] sm:$0xff]
      %v1059 = vld [vmem:[#allocation5 + $0x110] sm:$0xff]
      %v1060 = vld [vmem:[#allocation5 + $0x118] sm:$0xff]
      %v1061 = vld [vmem:[#allocation5 + $0x120] sm:$0xff]
      %v1062 = vld [vmem:[#allocation5 + $0x128] sm:$0xff]
      %v1063 = vld [vmem:[#allocation5 + $0x130] sm:$0xff]
      %v1064 = vld [vmem:[#allocation5 + $0x138] sm:$0xff]
      %v1065 = vld [vmem:[#allocation5 + $0x140] sm:$0xff]
      %v1066 = vld [vmem:[#allocation5 + $0x148] sm:$0xff]
      %v1067 = vld [vmem:[#allocation5 + $0x150] sm:$0xff]
      %v1068 = vld [vmem:[#allocation5 + $0x158] sm:$0xff]
      %v1069 = vld [vmem:[#allocation5 + $0x160] sm:$0xff]
      %v1070 = vld [vmem:[#allocation5 + $0x168] sm:$0xff]
      %v1071 = vld [vmem:[#allocation5 + $0x170] sm:$0xff]
      %v1072 = vld [vmem:[#allocation5 + $0x178] sm:$0xff]
      %v1073 = vld [vmem:[#allocation5 + $0x180] sm:$0xff]
      %v1074 = vld [vmem:[#allocation5 + $0x188] sm:$0xff]
      %v1075 = vld [vmem:[#allocation5 + $0x190] sm:$0xff]
      %v1076 = vld [vmem:[#allocation5 + $0x198] sm:$0xff]
      %v1077 = vld [vmem:[#allocation5 + $0x1a0] sm:$0xff]
      %v1078 = vld [vmem:[#allocation5 + $0x1a8] sm:$0xff]
      %v1079 = vld [vmem:[#allocation5 + $0x1b0] sm:$0xff]
      %v1080 = vld [vmem:[#allocation5 + $0x1b8] sm:$0xff]
      %v1081 = vld [vmem:[#allocation5 + $0x1c0] sm:$0xff]
      %v1082 = vld [vmem:[#allocation5 + $0x1c8] sm:$0xff]
      %v1083 = vld [vmem:[#allocation5 + $0x1d0] sm:$0xff]
      %v1084 = vld [vmem:[#allocation5 + $0x1d8] sm:$0xff]
      %v1085 = vld [vmem:[#allocation5 + $0x1e0] sm:$0xff]
      %v1086 = vld [vmem:[#allocation5 + $0x1e8] sm:$0xff]
      %v1087 = vld [vmem:[#allocation5 + $0x1f0] sm:$0xff]
      %v1088 = vld [vmem:[#allocation5 + $0x1f8] sm:$0xff]
      %v1089 = vld [vmem:[#allocation5 + $0x200] sm:$0xff]
      %v1090 = vld [vmem:[#allocation5 + $0x208] sm:$0xff]
      %v1091 = vld [vmem:[#allocation5 + $0x210] sm:$0xff]
      %v1092 = vld [vmem:[#allocation5 + $0x218] sm:$0xff]
      %v1093 = vld [vmem:[#allocation5 + $0x220] sm:$0xff]
      %v1094 = vld [vmem:[#allocation5 + $0x228] sm:$0xff]
      %v1095 = vld [vmem:[#allocation5 + $0x230] sm:$0xff]
      %v1096 = vld [vmem:[#allocation5 + $0x238] sm:$0xff]
      %v1097 = vld [vmem:[%s2] sm:$0xff]
      %v1098 = vld [vmem:[%s2 + $0x8] sm:$0xff]
      %v1099 = vld [vmem:[%s2 + $0x10] sm:$0xff]
      %v1100 = vld [vmem:[%s2 + $0x18] sm:$0xff]
      %v1101 = vld [vmem:[%s2 + $0x20] sm:$0xff]
      %v1102 = vld [vmem:[%s2 + $0x28] sm:$0xff]
      %v1103 = vld [vmem:[%s2 + $0x30] sm:$0xff]
      %v1104 = vld [vmem:[%s2 + $0x38] sm:$0xff]
      %v1105 = vld [vmem:[%s2 + $0x40] sm:$0xff]
      %v1106 = vld [vmem:[%s2 + $0x48] sm:$0xff]
      %v1107 = vld [vmem:[%s2 + $0x50] sm:$0xff]
      %v1108 = vld [vmem:[%s2 + $0x58] sm:$0xff]
      %v1109 = vld [vmem:[%s2 + $0x60] sm:$0xff]
      %v1110 = vld [vmem:[%s2 + $0x68] sm:$0xff]
      %v1111 = vld [vmem:[%s2 + $0x70] sm:$0xff]
      %v1112 = vld [vmem:[%s2 + $0x78] sm:$0xff]
      %v1113 = vld [vmem:[%s2 + $0x80] sm:$0xff]
      %v1114 = vld [vmem:[%s2 + $0x88] sm:$0xff]
      %v1115 = vld [vmem:[%s2 + $0x90] sm:$0xff]
      %v1116 = vld [vmem:[%s2 + $0x98] sm:$0xff]
      %v1117 = vld [vmem:[%s2 + $0xa0] sm:$0xff]
      %v1118 = vld [vmem:[%s2 + $0xa8] sm:$0xff]
      %v1119 = vld [vmem:[%s2 + $0xb0] sm:$0xff]
      %v1120 = vld [vmem:[%s2 + $0xb8] sm:$0xff]
      %v1121 = vld [vmem:[%s2 + $0xc0] sm:$0xff]
      %v1122 = vld [vmem:[%s2 + $0xc8] sm:$0xff]
      %v1123 = vld [vmem:[%s2 + $0xd0] sm:$0xff]
      %v1124 = vld [vmem:[%s2 + $0xd8] sm:$0xff]
      %v1125 = vld [vmem:[%s2 + $0xe0] sm:$0xff]
      %v1126 = vld [vmem:[%s2 + $0xe8] sm:$0xff]
      %v1127 = vld [vmem:[%s2 + $0xf0] sm:$0xff]
      %v1128 = vld [vmem:[%s2 + $0xf8] sm:$0xff]
      %v1129 = vld [vmem:[%s2 + $0x100] sm:$0xff]
      %v1130 = vld [vmem:[%s2 + $0x108] sm:$0xff]
      %v1131 = vld [vmem:[%s2 + $0x110] sm:$0xff]
      %v1132 = vld [vmem:[%s2 + $0x118] sm:$0xff]
      %v1133 = vld [vmem:[%s2 + $0x120] sm:$0xff]
      %v1134 = vld [vmem:[%s2 + $0x128] sm:$0xff]
      %v1135 = vld [vmem:[%s2 + $0x130] sm:$0xff]
      %v1136 = vld [vmem:[%s2 + $0x138] sm:$0xff]
      %v1137 = vld [vmem:[%s2 + $0x140] sm:$0xff]
      %v1138 = vld [vmem:[%s2 + $0x148] sm:$0xff]
      %v1139 = vld [vmem:[%s2 + $0x150] sm:$0xff]
      %v1140 = vld [vmem:[%s2 + $0x158] sm:$0xff]
      %v1141 = vld [vmem:[%s2 + $0x160] sm:$0xff]
      %v1142 = vld [vmem:[%s2 + $0x168] sm:$0xff]
      %v1143 = vld [vmem:[%s2 + $0x170] sm:$0xff]
      %v1144 = vld [vmem:[%s2 + $0x178] sm:$0xff]
      %v1145 = vld [vmem:[%s2 + $0x180] sm:$0xff]
      %v1146 = vld [vmem:[%s2 + $0x188] sm:$0xff]
      %v1147 = vld [vmem:[%s2 + $0x190] sm:$0xff]
      %v1148 = vld [vmem:[%s2 + $0x198] sm:$0xff]
      %v1149 = vld [vmem:[%s2 + $0x1a0] sm:$0xff]
      %v1150 = vld [vmem:[%s2 + $0x1a8] sm:$0xff]
      %v1151 = vld [vmem:[%s2 + $0x1b0] sm:$0xff]
      %v1152 = vld [vmem:[%s2 + $0x1b8] sm:$0xff]
      %v1153 = vld [vmem:[%s2 + $0x1c0] sm:$0xff]
      %v1154 = vld [vmem:[%s2 + $0x1c8] sm:$0xff]
      %v1155 = vld [vmem:[%s2 + $0x1d0] sm:$0xff]
      %v1156 = vld [vmem:[%s2 + $0x1d8] sm:$0xff]
      %v1157 = vld [vmem:[%s2 + $0x1e0] sm:$0xff]
      %v1158 = vld [vmem:[%s2 + $0x1e8] sm:$0xff]
      %v1159 = vld [vmem:[%s2 + $0x1f0] sm:$0xff]
      %v1160 = vld [vmem:[%s2 + $0x1f8] sm:$0xff]
      %v1161 = vld [vmem:[%s2 + $0x200] sm:$0xff]
      %v1162 = vld [vmem:[%s2 + $0x208] sm:$0xff]
      %v1163 = vld [vmem:[%s2 + $0x210] sm:$0xff]
      %v1164 = vld [vmem:[%s2 + $0x218] sm:$0xff]
      %v1165 = vld [vmem:[%s2 + $0x220] sm:$0xff]
      %v1166 = vld [vmem:[%s2 + $0x228] sm:$0xff]
      %v1167 = vld [vmem:[%s2 + $0x230] sm:$0xff]
      %v1168 = vld [vmem:[%s2 + $0x238] sm:$0xff]
      %v1169 = vld [vmem:[%s2 + $0x240] sm:$0xff]
      %v1170 = vld [vmem:[%s2 + $0x248] sm:$0xff]
      %v1171 = vld [vmem:[%s2 + $0x250] sm:$0xff]
      %v1172 = vld [vmem:[%s2 + $0x258] sm:$0xff]
      %v1173 = vld [vmem:[%s2 + $0x260] sm:$0xff]
      %v1174 = vld [vmem:[%s2 + $0x268] sm:$0xff]
      %v1175 = vld [vmem:[%s2 + $0x270] sm:$0xff]
      %v1176 = vld [vmem:[%s2 + $0x278] sm:$0xff]
      %v1177 = vld [vmem:[%s2 + $0x280] sm:$0xff]
      %v1178 = vld [vmem:[%s2 + $0x288] sm:$0xff]
      %v1179 = vld [vmem:[%s2 + $0x290] sm:$0xff]
      %v1180 = vld [vmem:[%s2 + $0x298] sm:$0xff]
      %v1181 = vld [vmem:[%s2 + $0x2a0] sm:$0xff]
      %v1182 = vld [vmem:[%s2 + $0x2a8] sm:$0xff]
      %v1183 = vld [vmem:[%s2 + $0x2b0] sm:$0xff]
      %v1184 = vld [vmem:[%s2 + $0x2b8] sm:$0xff]
      %v1185 = vld [vmem:[%s2 + $0x2c0] sm:$0xff]
      %v1186 = vld [vmem:[%s2 + $0x2c8] sm:$0xff]
      %v1187 = vld [vmem:[%s2 + $0x2d0] sm:$0xff]
      %v1188 = vld [vmem:[%s2 + $0x2d8] sm:$0xff]
      %v1189 = vld [vmem:[%s2 + $0x2e0] sm:$0xff]
      %v1190 = vld [vmem:[%s2 + $0x2e8] sm:$0xff]
      %v1191 = vld [vmem:[%s2 + $0x2f0] sm:$0xff]
      %v1192 = vld [vmem:[%s2 + $0x2f8] sm:$0xff]
      %v1193 = vld [vmem:[%s2 + $0x300] sm:$0xff]
      %v1194 = vld [vmem:[%s2 + $0x308] sm:$0xff]
      %v1195 = vld [vmem:[%s2 + $0x310] sm:$0xff]
      %v1196 = vld [vmem:[%s2 + $0x318] sm:$0xff]
      %v1197 = vld [vmem:[%s2 + $0x320] sm:$0xff]
      %v1198 = vld [vmem:[%s2 + $0x328] sm:$0xff]
      %v1199 = vld [vmem:[%s2 + $0x330] sm:$0xff]
      %v1200 = vld [vmem:[%s2 + $0x338] sm:$0xff]
      %v1201 = vld [vmem:[%s2 + $0x340] sm:$0xff]
      %v1202 = vld [vmem:[%s2 + $0x348] sm:$0xff]
      %v1203 = vld [vmem:[%s2 + $0x350] sm:$0xff]
      %v1204 = vld [vmem:[%s2 + $0x358] sm:$0xff]
      %v1205 = vld [vmem:[%s2 + $0x360] sm:$0xff]
      %v1206 = vld [vmem:[%s2 + $0x368] sm:$0xff]
      %v1207 = vld [vmem:[%s2 + $0x370] sm:$0xff]
      %v1208 = vld [vmem:[%s2 + $0x378] sm:$0xff]
      %v1209 = vld [vmem:[%s2 + $0x380] sm:$0xff]
      %v1210 = vld [vmem:[%s2 + $0x388] sm:$0xff]
      %v1211 = vld [vmem:[%s2 + $0x390] sm:$0xff]
      %v1212 = vld [vmem:[%s2 + $0x398] sm:$0xff]
      %v1213 = vld [vmem:[%s2 + $0x3a0] sm:$0xff]
      %v1214 = vld [vmem:[%s2 + $0x3a8] sm:$0xff]
      %v1215 = vld [vmem:[%s2 + $0x3b0] sm:$0xff]
      %v1216 = vld [vmem:[%s2 + $0x3b8] sm:$0xff]
      %v1217 = vld [vmem:[%s2 + $0x3c0] sm:$0xff]
      %v1218 = vld [vmem:[%s2 + $0x3c8] sm:$0xff]
      %v1219 = vld [vmem:[%s2 + $0x3d0] sm:$0xff]
      %v1220 = vld [vmem:[%s2 + $0x3d8] sm:$0xff]
      %v1221 = vld [vmem:[%s2 + $0x3e0] sm:$0xff]
      %v1222 = vld [vmem:[%s2 + $0x3e8] sm:$0xff]
      %v1223 = vld [vmem:[%s2 + $0x3f0] sm:$0xff]
      %v1224 = vld [vmem:[%s2 + $0x3f8] sm:$0xff]
      %v1225 = vld [vmem:[%s2 + $0x400] sm:$0xff]
      %v1226 = vld [vmem:[%s2 + $0x408] sm:$0xff]
      %v1227 = vld [vmem:[%s2 + $0x410] sm:$0xff]
      %v1228 = vld [vmem:[%s2 + $0x418] sm:$0xff]
      %v1229 = vld [vmem:[%s2 + $0x420] sm:$0xff]
      %v1230 = vld [vmem:[%s2 + $0x428] sm:$0xff]
      %v1231 = vld [vmem:[%s2 + $0x430] sm:$0xff]
      %v1232 = vld [vmem:[%s2 + $0x438] sm:$0xff]
      %v1233 = vld [vmem:[%s2 + $0x440] sm:$0xff]
      %v1234 = vld [vmem:[%s2 + $0x448] sm:$0xff]
      %v1235 = vld [vmem:[%s2 + $0x450] sm:$0xff]
      %v1236 = vld [vmem:[%s2 + $0x458] sm:$0xff]
      %v1237 = vld [vmem:[%s2 + $0x460] sm:$0xff]
      %v1238 = vld [vmem:[%s2 + $0x468] sm:$0xff]
      %v1239 = vld [vmem:[%s2 + $0x470] sm:$0xff]
      %v1240 = vld [vmem:[%s2 + $0x478] sm:$0xff]
      %1241 = vmatprep.subr.mxu0 0.0
      %1242 = vmatpush1.msra.mxu0 %v1112
      %1243 = vmatprep.subr.mxu0 0.0
      %1244 = vmatpush1.msra.mxu0 %v1111
      %1245 = vmatprep.subr.mxu0 0.0
      %1246 = vmatpush1.msra.mxu0 %v1110
      %1247 = vmatprep.subr.mxu0 0.0
      %1248 = vmatpush1.msra.mxu0 %v1109
      %1249 = vmatprep.subr.mxu0 0.0
      %1250 = vmatpush1.msra.mxu0 %v1108
      %1251 = vmatprep.subr.mxu0 0.0
      %1252 = vmatpush1.msra.mxu0 %v1107
      %1253 = vmatprep.subr.mxu0 0.0
      %1254 = vmatpush1.msra.mxu0 %v1106
      %1255 = vmatprep.subr.mxu0 0.0
      %1256 = vmatpush1.msra.mxu0 %v1105
      %1257 = vmatprep.subr.mxu0 0.0
      %1258 = vmatpush1.msra.mxu0 %v1104
      %1259 = vmatprep.subr.mxu0 0.0
      %1260 = vmatpush1.msra.mxu0 %v1103
      %1261 = vmatprep.subr.mxu0 0.0
      %1262 = vmatpush1.msra.mxu0 %v1102
      %1263 = vmatprep.subr.mxu0 0.0
      %1264 = vmatpush1.msra.mxu0 %v1101
      %1265 = vmatprep.subr.mxu0 0.0
      %1266 = vmatpush1.msra.mxu0 %v1100
      %1267 = vmatprep.subr.mxu0 0.0
      %1268 = vmatpush1.msra.mxu0 %v1099
      %1269 = vmatprep.subr.mxu0 0.0
      %1270 = vmatpush1.msra.mxu0 %v1098
      %1271 = vmatprep.subr.mxu0 0.0
      %1272 = vmatpush1.msra.mxu0 %v1097
      %1273 = vmatprep.subr.mxu0 0.0
      %1274 = vmatpush2.msra.mxu0 %v1128
      %1275 = vmatprep.subr.mxu0 0.0
      %1276 = vmatpush2.msra.mxu0 %v1127
      %1277 = vmatprep.subr.mxu0 0.0
      %1278 = vmatpush2.msra.mxu0 %v1126
      %1279 = vmatprep.subr.mxu0 0.0
      %1280 = vmatpush2.msra.mxu0 %v1125
      %1281 = vmatprep.subr.mxu0 0.0
      %1282 = vmatpush2.msra.mxu0 %v1124
      %1283 = vmatprep.subr.mxu0 0.0
      %1284 = vmatpush2.msra.mxu0 %v1123
      %1285 = vmatprep.subr.mxu0 0.0
      %1286 = vmatpush2.msra.mxu0 %v1122
      %1287 = vmatprep.subr.mxu0 0.0
      %1288 = vmatpush2.msra.mxu0 %v1121
      %1289 = vmatprep.subr.mxu0 0.0
      %1290 = vmatpush2.msra.mxu0 %v1120
      %1291 = vmatprep.subr.mxu0 0.0
      %1292 = vmatpush2.msra.mxu0 %v1119
      %1293 = vmatprep.subr.mxu0 0.0
      %1294 = vmatpush2.msra.mxu0 %v1118
      %1295 = vmatprep.subr.mxu0 0.0
      %1296 = vmatpush2.msra.mxu0 %v1117
      %1297 = vmatprep.subr.mxu0 0.0
      %1298 = vmatpush2.msra.mxu0 %v1116
      %1299 = vmatprep.subr.mxu0 0.0
      %1300 = vmatpush2.msra.mxu0 %v1115
      %1301 = vmatprep.subr.mxu0 0.0
      %1302 = vmatpush2.msra.mxu0 %v1114
      %1303 = vmatprep.subr.mxu0 0.0
      %1304 = vmatpush2.msra.mxu0 %v1113
      %1305 = vmatprep.mubr.f32.mxu0 %v1026
      %1306 = vmatmul.mubr.f32.gmra.mxu0 %v1025
      %v1307 = vpop.f32.mrf.mxu0
      %v1308 = vadd.f32 0.0, %v1307
      %v1309 = vpop.f32.mrf.mxu0
      %1310 = vmatprep.mubr.f32.mxu0 %v1035
      %1311 = vmatmul.mubr.f32.gmra.mxu0 %v1034
      %v1312 = vpop.f32.mrf.mxu0
      %v1313 = vadd.f32 0.0, %v1312
      %v1314 = vpop.f32.mrf.mxu0
      %1315 = vmatprep.mubr.f32.mxu0 %v1044
      %1316 = vmatmul.mubr.f32.gmra.mxu0 %v1043
      %v1317 = vpop.f32.mrf.mxu0
      %v1318 = vadd.f32 0.0, %v1317
      %v1319 = vpop.f32.mrf.mxu0
      %1320 = vmatprep.mubr.f32.mxu0 %v1053
      %1321 = vmatmul.mubr.f32.gmra.mxu0 %v1052
      %v1322 = vpop.f32.mrf.mxu0
      %v1323 = vadd.f32 0.0, %v1322
      %v1324 = vpop.f32.mrf.mxu0
      %1325 = vmatprep.mubr.f32.mxu0 %v1062
      %1326 = vmatmul.mubr.f32.gmra.mxu0 %v1061
      %v1327 = vpop.f32.mrf.mxu0
      %v1328 = vadd.f32 0.0, %v1327
      %v1329 = vpop.f32.mrf.mxu0
      %1330 = vmatprep.mubr.f32.mxu0 %v1071
      %1331 = vmatmul.mubr.f32.gmra.mxu0 %v1070
      %v1332 = vpop.f32.mrf.mxu0
      %v1333 = vadd.f32 0.0, %v1332
      %v1334 = vpop.f32.mrf.mxu0
      %1335 = vmatprep.mubr.f32.mxu0 %v1080
      %1336 = vmatmul.mubr.f32.gmra.mxu0 %v1079
      %v1337 = vpop.f32.mrf.mxu0
      %v1338 = vadd.f32 0.0, %v1337
      %v1339 = vpop.f32.mrf.mxu0
      %1340 = vmatprep.mubr.f32.mxu0 %v1089
      %1341 = vmatmul.mubr.f32.gmra.mxu0 %v1088
      %v1342 = vpop.f32.mrf.mxu0
      %v1343 = vadd.f32 0.0, %v1342
      %v1344 = vpop.f32.mrf.mxu0
      %1345 = vdwg.mxu0
      %1346 = vmatprep.subr.mxu0 0.0
      %1347 = vmatpush1.msra.mxu0 %v1144
      %1348 = vmatprep.subr.mxu0 0.0
      %1349 = vmatpush1.msra.mxu0 %v1143
      %1350 = vmatprep.subr.mxu0 0.0
      %1351 = vmatpush1.msra.mxu0 %v1142
      %1352 = vmatprep.subr.mxu0 0.0
      %1353 = vmatpush1.msra.mxu0 %v1141
      %1354 = vmatprep.subr.mxu0 0.0
      %1355 = vmatpush1.msra.mxu0 %v1140
      %1356 = vmatprep.subr.mxu0 0.0
      %1357 = vmatpush1.msra.mxu0 %v1139
      %1358 = vmatprep.subr.mxu0 0.0
      %1359 = vmatpush1.msra.mxu0 %v1138
      %1360 = vmatprep.subr.mxu0 0.0
      %1361 = vmatpush1.msra.mxu0 %v1137
      %1362 = vmatprep.subr.mxu0 0.0
      %1363 = vmatpush1.msra.mxu0 %v1136
      %1364 = vmatprep.subr.mxu0 0.0
      %1365 = vmatpush1.msra.mxu0 %v1135
      %1366 = vmatprep.subr.mxu0 0.0
      %1367 = vmatpush1.msra.mxu0 %v1134
      %1368 = vmatprep.subr.mxu0 0.0
      %1369 = vmatpush1.msra.mxu0 %v1133
      %1370 = vmatprep.subr.mxu0 0.0
      %1371 = vmatpush1.msra.mxu0 %v1132
      %1372 = vmatprep.subr.mxu0 0.0
      %1373 = vmatpush1.msra.mxu0 %v1131
      %1374 = vmatprep.subr.mxu0 0.0
      %1375 = vmatpush1.msra.mxu0 %v1130
      %1376 = vmatprep.subr.mxu0 0.0
      %1377 = vmatpush1.msra.mxu0 %v1129
      %1378 = vmatprep.subr.mxu0 0.0
      %1379 = vmatpush2.msra.mxu0 %v1160
      %1380 = vmatprep.subr.mxu0 0.0
      %1381 = vmatpush2.msra.mxu0 %v1159
      %1382 = vmatprep.subr.mxu0 0.0
      %1383 = vmatpush2.msra.mxu0 %v1158
      %1384 = vmatprep.subr.mxu0 0.0
      %1385 = vmatpush2.msra.mxu0 %v1157
      %1386 = vmatprep.subr.mxu0 0.0
      %1387 = vmatpush2.msra.mxu0 %v1156
      %1388 = vmatprep.subr.mxu0 0.0
      %1389 = vmatpush2.msra.mxu0 %v1155
      %1390 = vmatprep.subr.mxu0 0.0
      %1391 = vmatpush2.msra.mxu0 %v1154
      %1392 = vmatprep.subr.mxu0 0.0
      %1393 = vmatpush2.msra.mxu0 %v1153
      %1394 = vmatprep.subr.mxu0 0.0
      %1395 = vmatpush2.msra.mxu0 %v1152
      %1396 = vmatprep.subr.mxu0 0.0
      %1397 = vmatpush2.msra.mxu0 %v1151
      %1398 = vmatprep.subr.mxu0 0.0
      %1399 = vmatpush2.msra.mxu0 %v1150
      %1400 = vmatprep.subr.mxu0 0.0
      %1401 = vmatpush2.msra.mxu0 %v1149
      %1402 = vmatprep.subr.mxu0 0.0
      %1403 = vmatpush2.msra.mxu0 %v1148
      %1404 = vmatprep.subr.mxu0 0.0
      %1405 = vmatpush2.msra.mxu0 %v1147
      %1406 = vmatprep.subr.mxu0 0.0
      %1407 = vmatpush2.msra.mxu0 %v1146
      %1408 = vmatprep.subr.mxu0 0.0
      %1409 = vmatpush2.msra.mxu0 %v1145
      %1410 = vmatprep.mubr.f32.mxu0 %v1028
      %1411 = vmatmul.mubr.f32.gmra.mxu0 %v1027
      %v1412 = vpop.f32.mrf.mxu0
      %v1413 = vadd.f32 %v1308, %v1412
      %v1414 = vpop.f32.mrf.mxu0
      %1415 = vmatprep.mubr.f32.mxu0 %v1037
      %1416 = vmatmul.mubr.f32.gmra.mxu0 %v1036
      %v1417 = vpop.f32.mrf.mxu0
      %v1418 = vadd.f32 %v1313, %v1417
      %v1419 = vpop.f32.mrf.mxu0
      %1420 = vmatprep.mubr.f32.mxu0 %v1046
      %1421 = vmatmul.mubr.f32.gmra.mxu0 %v1045
      %v1422 = vpop.f32.mrf.mxu0
      %v1423 = vadd.f32 %v1318, %v1422
      %v1424 = vpop.f32.mrf.mxu0
      %1425 = vmatprep.mubr.f32.mxu0 %v1055
      %1426 = vmatmul.mubr.f32.gmra.mxu0 %v1054
      %v1427 = vpop.f32.mrf.mxu0
      %v1428 = vadd.f32 %v1323, %v1427
      %v1429 = vpop.f32.mrf.mxu0
      %1430 = vmatprep.mubr.f32.mxu0 %v1064
      %1431 = vmatmul.mubr.f32.gmra.mxu0 %v1063
      %v1432 = vpop.f32.mrf.mxu0
      %v1433 = vadd.f32 %v1328, %v1432
      %v1434 = vpop.f32.mrf.mxu0
      %1435 = vmatprep.mubr.f32.mxu0 %v1073
      %1436 = vmatmul.mubr.f32.gmra.mxu0 %v1072
      %v1437 = vpop.f32.mrf.mxu0
      %v1438 = vadd.f32 %v1333, %v1437
      %v1439 = vpop.f32.mrf.mxu0
      %1440 = vmatprep.mubr.f32.mxu0 %v1082
      %1441 = vmatmul.mubr.f32.gmra.mxu0 %v1081
      %v1442 = vpop.f32.mrf.mxu0
      %v1443 = vadd.f32 %v1338, %v1442
      %v1444 = vpop.f32.mrf.mxu0
      %1445 = vmatprep.mubr.f32.mxu0 %v1091
      %1446 = vmatmul.mubr.f32.gmra.mxu0 %v1090
      %v1447 = vpop.f32.mrf.mxu0
      %v1448 = vadd.f32 %v1343, %v1447
      %v1449 = vpop.f32.mrf.mxu0
      %1450 = vdwg.mxu0
      %1451 = vmatprep.subr.mxu0 0.0
      %1452 = vmatpush1.msra.mxu0 %v1176
      %1453 = vmatprep.subr.mxu0 0.0
      %1454 = vmatpush1.msra.mxu0 %v1175
      %1455 = vmatprep.subr.mxu0 0.0
      %1456 = vmatpush1.msra.mxu0 %v1174
      %1457 = vmatprep.subr.mxu0 0.0
      %1458 = vmatpush1.msra.mxu0 %v1173
      %1459 = vmatprep.subr.mxu0 0.0
      %1460 = vmatpush1.msra.mxu0 %v1172
      %1461 = vmatprep.subr.mxu0 0.0
      %1462 = vmatpush1.msra.mxu0 %v1171
      %1463 = vmatprep.subr.mxu0 0.0
      %1464 = vmatpush1.msra.mxu0 %v1170
      %1465 = vmatprep.subr.mxu0 0.0
      %1466 = vmatpush1.msra.mxu0 %v1169
      %1467 = vmatprep.subr.mxu0 0.0
      %1468 = vmatpush1.msra.mxu0 %v1168
      %1469 = vmatprep.subr.mxu0 0.0
      %1470 = vmatpush1.msra.mxu0 %v1167
      %1471 = vmatprep.subr.mxu0 0.0
      %1472 = vmatpush1.msra.mxu0 %v1166
      %1473 = vmatprep.subr.mxu0 0.0
      %1474 = vmatpush1.msra.mxu0 %v1165
      %1475 = vmatprep.subr.mxu0 0.0
      %1476 = vmatpush1.msra.mxu0 %v1164
      %1477 = vmatprep.subr.mxu0 0.0
      %1478 = vmatpush1.msra.mxu0 %v1163
      %1479 = vmatprep.subr.mxu0 0.0
      %1480 = vmatpush1.msra.mxu0 %v1162
      %1481 = vmatprep.subr.mxu0 0.0
      %1482 = vmatpush1.msra.mxu0 %v1161
      %1483 = vmatprep.subr.mxu0 0.0
      %1484 = vmatpush2.msra.mxu0 %v1192
      %1485 = vmatprep.subr.mxu0 0.0
      %1486 = vmatpush2.msra.mxu0 %v1191
      %1487 = vmatprep.subr.mxu0 0.0
      %1488 = vmatpush2.msra.mxu0 %v1190
      %1489 = vmatprep.subr.mxu0 0.0
      %1490 = vmatpush2.msra.mxu0 %v1189
      %1491 = vmatprep.subr.mxu0 0.0
      %1492 = vmatpush2.msra.mxu0 %v1188
      %1493 = vmatprep.subr.mxu0 0.0
      %1494 = vmatpush2.msra.mxu0 %v1187
      %1495 = vmatprep.subr.mxu0 0.0
      %1496 = vmatpush2.msra.mxu0 %v1186
      %1497 = vmatprep.subr.mxu0 0.0
      %1498 = vmatpush2.msra.mxu0 %v1185
      %1499 = vmatprep.subr.mxu0 0.0
      %1500 = vmatpush2.msra.mxu0 %v1184
      %1501 = vmatprep.subr.mxu0 0.0
      %1502 = vmatpush2.msra.mxu0 %v1183
      %1503 = vmatprep.subr.mxu0 0.0
      %1504 = vmatpush2.msra.mxu0 %v1182
      %1505 = vmatprep.subr.mxu0 0.0
      %1506 = vmatpush2.msra.mxu0 %v1181
      %1507 = vmatprep.subr.mxu0 0.0
      %1508 = vmatpush2.msra.mxu0 %v1180
      %1509 = vmatprep.subr.mxu0 0.0
      %1510 = vmatpush2.msra.mxu0 %v1179
      %1511 = vmatprep.subr.mxu0 0.0
      %1512 = vmatpush2.msra.mxu0 %v1178
      %1513 = vmatprep.subr.mxu0 0.0
      %1514 = vmatpush2.msra.mxu0 %v1177
      %1515 = vmatprep.mubr.f32.mxu0 %v1030
      %1516 = vmatmul.mubr.f32.gmra.mxu0 %v1029
      %v1517 = vpop.f32.mrf.mxu0
      %v1518 = vadd.f32 %v1413, %v1517
      %v1519 = vpop.f32.mrf.mxu0
      %1520 = vmatprep.mubr.f32.mxu0 %v1039
      %1521 = vmatmul.mubr.f32.gmra.mxu0 %v1038
      %v1522 = vpop.f32.mrf.mxu0
      %v1523 = vadd.f32 %v1418, %v1522
      %v1524 = vpop.f32.mrf.mxu0
      %1525 = vmatprep.mubr.f32.mxu0 %v1048
      %1526 = vmatmul.mubr.f32.gmra.mxu0 %v1047
      %v1527 = vpop.f32.mrf.mxu0
      %v1528 = vadd.f32 %v1423, %v1527
      %v1529 = vpop.f32.mrf.mxu0
      %1530 = vmatprep.mubr.f32.mxu0 %v1057
      %1531 = vmatmul.mubr.f32.gmra.mxu0 %v1056
      %v1532 = vpop.f32.mrf.mxu0
      %v1533 = vadd.f32 %v1428, %v1532
      %v1534 = vpop.f32.mrf.mxu0
      %1535 = vmatprep.mubr.f32.mxu0 %v1066
      %1536 = vmatmul.mubr.f32.gmra.mxu0 %v1065
      %v1537 = vpop.f32.mrf.mxu0
      %v1538 = vadd.f32 %v1433, %v1537
      %v1539 = vpop.f32.mrf.mxu0
      %1540 = vmatprep.mubr.f32.mxu0 %v1075
      %1541 = vmatmul.mubr.f32.gmra.mxu0 %v1074
      %v1542 = vpop.f32.mrf.mxu0
      %v1543 = vadd.f32 %v1438, %v1542
      %v1544 = vpop.f32.mrf.mxu0
      %1545 = vmatprep.mubr.f32.mxu0 %v1084
      %1546 = vmatmul.mubr.f32.gmra.mxu0 %v1083
      %v1547 = vpop.f32.mrf.mxu0
      %v1548 = vadd.f32 %v1443, %v1547
      %v1549 = vpop.f32.mrf.mxu0
      %1550 = vmatprep.mubr.f32.mxu0 %v1093
      %1551 = vmatmul.mubr.f32.gmra.mxu0 %v1092
      %v1552 = vpop.f32.mrf.mxu0
      %v1553 = vadd.f32 %v1448, %v1552
      %v1554 = vpop.f32.mrf.mxu0
      %1555 = vdwg.mxu0
      %1556 = vmatprep.subr.mxu0 0.0
      %1557 = vmatpush1.msra.mxu0 %v1208
      %1558 = vmatprep.subr.mxu0 0.0
      %1559 = vmatpush1.msra.mxu0 %v1207
      %1560 = vmatprep.subr.mxu0 0.0
      %1561 = vmatpush1.msra.mxu0 %v1206
      %1562 = vmatprep.subr.mxu0 0.0
      %1563 = vmatpush1.msra.mxu0 %v1205
      %1564 = vmatprep.subr.mxu0 0.0
      %1565 = vmatpush1.msra.mxu0 %v1204
      %1566 = vmatprep.subr.mxu0 0.0
      %1567 = vmatpush1.msra.mxu0 %v1203
      %1568 = vmatprep.subr.mxu0 0.0
      %1569 = vmatpush1.msra.mxu0 %v1202
      %1570 = vmatprep.subr.mxu0 0.0
      %1571 = vmatpush1.msra.mxu0 %v1201
      %1572 = vmatprep.subr.mxu0 0.0
      %1573 = vmatpush1.msra.mxu0 %v1200
      %1574 = vmatprep.subr.mxu0 0.0
      %1575 = vmatpush1.msra.mxu0 %v1199
      %1576 = vmatprep.subr.mxu0 0.0
      %1577 = vmatpush1.msra.mxu0 %v1198
      %1578 = vmatprep.subr.mxu0 0.0
      %1579 = vmatpush1.msra.mxu0 %v1197
      %1580 = vmatprep.subr.mxu0 0.0
      %1581 = vmatpush1.msra.mxu0 %v1196
      %1582 = vmatprep.subr.mxu0 0.0
      %1583 = vmatpush1.msra.mxu0 %v1195
      %1584 = vmatprep.subr.mxu0 0.0
      %1585 = vmatpush1.msra.mxu0 %v1194
      %1586 = vmatprep.subr.mxu0 0.0
      %1587 = vmatpush1.msra.mxu0 %v1193
      %1588 = vmatprep.subr.mxu0 0.0
      %1589 = vmatpush2.msra.mxu0 %v1224
      %1590 = vmatprep.subr.mxu0 0.0
      %1591 = vmatpush2.msra.mxu0 %v1223
      %1592 = vmatprep.subr.mxu0 0.0
      %1593 = vmatpush2.msra.mxu0 %v1222
      %1594 = vmatprep.subr.mxu0 0.0
      %1595 = vmatpush2.msra.mxu0 %v1221
      %1596 = vmatprep.subr.mxu0 0.0
      %1597 = vmatpush2.msra.mxu0 %v1220
      %1598 = vmatprep.subr.mxu0 0.0
      %1599 = vmatpush2.msra.mxu0 %v1219
      %1600 = vmatprep.subr.mxu0 0.0
      %1601 = vmatpush2.msra.mxu0 %v1218
      %1602 = vmatprep.subr.mxu0 0.0
      %1603 = vmatpush2.msra.mxu0 %v1217
      %1604 = vmatprep.subr.mxu0 0.0
      %1605 = vmatpush2.msra.mxu0 %v1216
      %1606 = vmatprep.subr.mxu0 0.0
      %1607 = vmatpush2.msra.mxu0 %v1215
      %1608 = vmatprep.subr.mxu0 0.0
      %1609 = vmatpush2.msra.mxu0 %v1214
      %1610 = vmatprep.subr.mxu0 0.0
      %1611 = vmatpush2.msra.mxu0 %v1213
      %1612 = vmatprep.subr.mxu0 0.0
      %1613 = vmatpush2.msra.mxu0 %v1212
      %1614 = vmatprep.subr.mxu0 0.0
      %1615 = vmatpush2.msra.mxu0 %v1211
      %1616 = vmatprep.subr.mxu0 0.0
      %1617 = vmatpush2.msra.mxu0 %v1210
      %1618 = vmatprep.subr.mxu0 0.0
      %1619 = vmatpush2.msra.mxu0 %v1209
      %1620 = vmatprep.mubr.f32.mxu0 %v1032
      %1621 = vmatmul.mubr.f32.gmra.mxu0 %v1031
      %v1622 = vpop.f32.mrf.mxu0
      %v1623 = vadd.f32 %v1518, %v1622
      %v1624 = vpop.f32.mrf.mxu0
      %1625 = vmatprep.mubr.f32.mxu0 %v1041
      %1626 = vmatmul.mubr.f32.gmra.mxu0 %v1040
      %v1627 = vpop.f32.mrf.mxu0
      %v1628 = vadd.f32 %v1523, %v1627
      %v1629 = vpop.f32.mrf.mxu0
      %1630 = vmatprep.mubr.f32.mxu0 %v1050
      %1631 = vmatmul.mubr.f32.gmra.mxu0 %v1049
      %v1632 = vpop.f32.mrf.mxu0
      %v1633 = vadd.f32 %v1528, %v1632
      %v1634 = vpop.f32.mrf.mxu0
      %1635 = vmatprep.mubr.f32.mxu0 %v1059
      %1636 = vmatmul.mubr.f32.gmra.mxu0 %v1058
      %v1637 = vpop.f32.mrf.mxu0
      %v1638 = vadd.f32 %v1533, %v1637
      %v1639 = vpop.f32.mrf.mxu0
      %1640 = vmatprep.mubr.f32.mxu0 %v1068
      %1641 = vmatmul.mubr.f32.gmra.mxu0 %v1067
      %v1642 = vpop.f32.mrf.mxu0
      %v1643 = vadd.f32 %v1538, %v1642
      %v1644 = vpop.f32.mrf.mxu0
      %1645 = vmatprep.mubr.f32.mxu0 %v1077
      %1646 = vmatmul.mubr.f32.gmra.mxu0 %v1076
      %v1647 = vpop.f32.mrf.mxu0
      %v1648 = vadd.f32 %v1543, %v1647
      %v1649 = vpop.f32.mrf.mxu0
      %1650 = vmatprep.mubr.f32.mxu0 %v1086
      %1651 = vmatmul.mubr.f32.gmra.mxu0 %v1085
      %v1652 = vpop.f32.mrf.mxu0
      %v1653 = vadd.f32 %v1548, %v1652
      %v1654 = vpop.f32.mrf.mxu0
      %1655 = vmatprep.mubr.f32.mxu0 %v1095
      %1656 = vmatmul.mubr.f32.gmra.mxu0 %v1094
      %v1657 = vpop.f32.mrf.mxu0
      %v1658 = vadd.f32 %v1553, %v1657
      %v1659 = vpop.f32.mrf.mxu0
      %1660 = vdwg.mxu0
      %1661 = vmatprep.subr.mxu0 0.0
      %1662 = vmatpush1.msra.mxu0 %v1240
      %1663 = vmatprep.subr.mxu0 0.0
      %1664 = vmatpush1.msra.mxu0 %v1239
      %1665 = vmatprep.subr.mxu0 0.0
      %1666 = vmatpush1.msra.mxu0 %v1238
      %1667 = vmatprep.subr.mxu0 0.0
      %1668 = vmatpush1.msra.mxu0 %v1237
      %1669 = vmatprep.subr.mxu0 0.0
      %1670 = vmatpush1.msra.mxu0 %v1236
      %1671 = vmatprep.subr.mxu0 0.0
      %1672 = vmatpush1.msra.mxu0 %v1235
      %1673 = vmatprep.subr.mxu0 0.0
      %1674 = vmatpush1.msra.mxu0 %v1234
      %1675 = vmatprep.subr.mxu0 0.0
      %1676 = vmatpush1.msra.mxu0 %v1233
      %1677 = vmatprep.subr.mxu0 0.0
      %1678 = vmatpush1.msra.mxu0 %v1232
      %1679 = vmatprep.subr.mxu0 0.0
      %1680 = vmatpush1.msra.mxu0 %v1231
      %1681 = vmatprep.subr.mxu0 0.0
      %1682 = vmatpush1.msra.mxu0 %v1230
      %1683 = vmatprep.subr.mxu0 0.0
      %1684 = vmatpush1.msra.mxu0 %v1229
      %1685 = vmatprep.subr.mxu0 0.0
      %1686 = vmatpush1.msra.mxu0 %v1228
      %1687 = vmatprep.subr.mxu0 0.0
      %1688 = vmatpush1.msra.mxu0 %v1227
      %1689 = vmatprep.subr.mxu0 0.0
      %1690 = vmatpush1.msra.mxu0 %v1226
      %1691 = vmatprep.subr.mxu0 0.0
      %1692 = vmatpush1.msra.mxu0 %v1225
      %1693 = vmatprep.subr.mxu0 0.0
      %1694 = vmatpush2.msra.mxu0 0.0
      %1695 = vmatprep.subr.mxu0 0.0
      %1696 = vmatpush2.msra.mxu0 0.0
      %1697 = vmatprep.subr.mxu0 0.0
      %1698 = vmatpush2.msra.mxu0 0.0
      %1699 = vmatprep.subr.mxu0 0.0
      %1700 = vmatpush2.msra.mxu0 0.0
      %1701 = vmatprep.subr.mxu0 0.0
      %1702 = vmatpush2.msra.mxu0 0.0
      %1703 = vmatprep.subr.mxu0 0.0
      %1704 = vmatpush2.msra.mxu0 0.0
      %1705 = vmatprep.subr.mxu0 0.0
      %1706 = vmatpush2.msra.mxu0 0.0
      %1707 = vmatprep.subr.mxu0 0.0
      %1708 = vmatpush2.msra.mxu0 0.0
      %1709 = vmatprep.subr.mxu0 0.0
      %1710 = vmatpush2.msra.mxu0 0.0
      %1711 = vmatprep.subr.mxu0 0.0
      %1712 = vmatpush2.msra.mxu0 0.0
      %1713 = vmatprep.subr.mxu0 0.0
      %1714 = vmatpush2.msra.mxu0 0.0
      %1715 = vmatprep.subr.mxu0 0.0
      %1716 = vmatpush2.msra.mxu0 0.0
      %1717 = vmatprep.subr.mxu0 0.0
      %1718 = vmatpush2.msra.mxu0 0.0
      %1719 = vmatprep.subr.mxu0 0.0
      %1720 = vmatpush2.msra.mxu0 0.0
      %1721 = vmatprep.subr.mxu0 0.0
      %1722 = vmatpush2.msra.mxu0 0.0
      %1723 = vmatprep.subr.mxu0 0.0
      %1724 = vmatpush2.msra.mxu0 0.0
      %1725 = vmatprep.mubr.f32.mxu0 0.0
      %1726 = vmatmul.mubr.f32.gmra.mxu0 %v1033
      %v1727 = vpop.f32.mrf.mxu0
      %v1728 = vadd.f32 %v1623, %v1727
      %v1729 = vpop.f32.mrf.mxu0
      %1730 = vmatprep.mubr.f32.mxu0 0.0
      %1731 = vmatmul.mubr.f32.gmra.mxu0 %v1042
      %v1732 = vpop.f32.mrf.mxu0
      %v1733 = vadd.f32 %v1628, %v1732
      %v1734 = vpop.f32.mrf.mxu0
      %1735 = vmatprep.mubr.f32.mxu0 0.0
      %1736 = vmatmul.mubr.f32.gmra.mxu0 %v1051
      %v1737 = vpop.f32.mrf.mxu0
      %v1738 = vadd.f32 %v1633, %v1737
      %v1739 = vpop.f32.mrf.mxu0
      %1740 = vmatprep.mubr.f32.mxu0 0.0
      %1741 = vmatmul.mubr.f32.gmra.mxu0 %v1060
      %v1742 = vpop.f32.mrf.mxu0
      %v1743 = vadd.f32 %v1638, %v1742
      %v1744 = vpop.f32.mrf.mxu0
      %1745 = vmatprep.mubr.f32.mxu0 0.0
      %1746 = vmatmul.mubr.f32.gmra.mxu0 %v1069
      %v1747 = vpop.f32.mrf.mxu0
      %v1748 = vadd.f32 %v1643, %v1747
      %v1749 = vpop.f32.mrf.mxu0
      %1750 = vmatprep.mubr.f32.mxu0 0.0
      %1751 = vmatmul.mubr.f32.gmra.mxu0 %v1078
      %v1752 = vpop.f32.mrf.mxu0
      %v1753 = vadd.f32 %v1648, %v1752
      %v1754 = vpop.f32.mrf.mxu0
      %1755 = vmatprep.mubr.f32.mxu0 0.0
      %1756 = vmatmul.mubr.f32.gmra.mxu0 %v1087
      %v1757 = vpop.f32.mrf.mxu0
      %v1758 = vadd.f32 %v1653, %v1757
      %v1759 = vpop.f32.mrf.mxu0
      %1760 = vmatprep.mubr.f32.mxu0 0.0
      %1761 = vmatmul.mubr.f32.gmra.mxu0 %v1096
      %v1762 = vpop.f32.mrf.mxu0
      %v1763 = vadd.f32 %v1658, %v1762
      %v1764 = vpop.f32.mrf.mxu0
      %1765 = vdwg.mxu0
      %v1766 = vadd.f32 %v1728, %v1733
      %v1767 = vadd.f32 %v1766, %v1738
      %v1768 = vadd.f32 %v1767, %v1743
      %v1769 = vadd.f32 %v1768, %v1748
      %v1770 = vadd.f32 %v1769, %v1753
      %v1771 = vadd.f32 %v1770, %v1758
      %v1772 = vadd.f32 %v1771, %v1763
      %v1773 = vrot.slane %v1772, 4
      %v1774 = vadd.f32 %v1772, %v1773
      %v1775 = vrot.slane %v1774, 2
      %v1776 = vadd.f32 %v1774, %v1775
      %v1777 = vrot.slane %v1776, 1
      %v1778 = vadd.f32 %v1776, %v1777
      %v1779 = vmul.f32 %v1778, %v810
      %v1780 = vmul.f32 %v1728, %v1728
      %v1781 = vmul.f32 %v1733, %v1733
      %v1782 = vmul.f32 %v1738, %v1738
      %v1783 = vmul.f32 %v1743, %v1743
      %v1784 = vmul.f32 %v1748, %v1748
      %v1785 = vmul.f32 %v1753, %v1753
      %v1786 = vmul.f32 %v1758, %v1758
      %v1787 = vmul.f32 %v1763, %v1763
      %v1788 = vadd.f32 %v1780, %v1781
      %v1789 = vadd.f32 %v1788, %v1782
      %v1790 = vadd.f32 %v1789, %v1783
      %v1791 = vadd.f32 %v1790, %v1784
      %v1792 = vadd.f32 %v1791, %v1785
      %v1793 = vadd.f32 %v1792, %v1786
      %v1794 = vadd.f32 %v1793, %v1787
      %v1795 = vrot.slane %v1794, 4
      %v1796 = vadd.f32 %v1794, %v1795
      %v1797 = vrot.slane %v1796, 2
      %v1798 = vadd.f32 %v1796, %v1797
      %v1799 = vrot.slane %v1798, 1
      %v1800 = vadd.f32 %v1798, %v1799
      %v1801 = vmul.f32 %v1800, %v810
      %v1802 = vmul.f32 %v1779, %v1779
      %v1803 = vsub.f32 %v1801, %v1802
      %v1804 = vmax.f32 %v1803, 0.0
      %v1805 = vsub.f32 %v1728, %v1779
      %v1806 = vsub.f32 %v1733, %v1779
      %v1807 = vsub.f32 %v1738, %v1779
      %v1808 = vsub.f32 %v1743, %v1779
      %v1809 = vsub.f32 %v1748, %v1779
      %v1810 = vsub.f32 %v1753, %v1779
      %v1811 = vsub.f32 %v1758, %v1779
      %v1812 = vsub.f32 %v1763, %v1779
      %v1813 = vadd.f32 %v1804, 1e-05
      %v1814 = vrsqrt.pop %v1813
      %v1815 = vmul.f32 %v1805, %v1814
      %v1816 = vmul.f32 %v1806, %v1814
      %v1817 = vmul.f32 %v1807, %v1814
      %v1818 = vmul.f32 %v1808, %v1814
      %v1819 = vmul.f32 %v1809, %v1814
      %v1820 = vmul.f32 %v1810, %v1814
      %v1821 = vmul.f32 %v1811, %v1814
      %v1822 = vmul.f32 %v1812, %v1814
      %v1823 = vmul.f32 %v1815, 0.2
      %v1824 = vmul.f32 %v1816, 0.2
      %v1825 = vmul.f32 %v1817, 0.2
      %v1826 = vmul.f32 %v1818, 0.2
      %v1827 = vmul.f32 %v1819, 0.2
      %v1828 = vmul.f32 %v1820, 0.2
      %v1829 = vmul.f32 %v1821, 0.2
      %v1830 = vmul.f32 %v1822, 0.2
      %v1831 = vmax.f32 %v1815, %v1823
      %v1832 = vmax.f32 %v1816, %v1824
      %v1833 = vmax.f32 %v1817, %v1825
      %v1834 = vmax.f32 %v1818, %v1826
      %v1835 = vmax.f32 %v1819, %v1827
      %v1836 = vmax.f32 %v1820, %v1828
      %v1837 = vmax.f32 %v1821, %v1829
      %v1838 = vmax.f32 %v1822, %v1830
      %1839 = vst [vmem:[%s170] sm:$0xff] %v1831
      %1840 = vst [vmem:[%s170 + $0x8] sm:$0xff] %v1832
      %1841 = vst [vmem:[%s170 + $0x10] sm:$0xff] %v1833
      %1842 = vst [vmem:[%s170 + $0x18] sm:$0xff] %v1834
      %1843 = vst [vmem:[%s170 + $0x20] sm:$0xff] %v1835
      %1844 = vst [vmem:[%s170 + $0x28] sm:$0xff] %v1836
      %1845 = vst [vmem:[%s170 + $0x30] sm:$0xff] %v1837
      %1846 = vst [vmem:[%s170 + $0x38] sm:$0xff] %v1838
      %p1847 = scmp.lt.s32.totalorder %s14, 1
      %s1848 = scalar_select %p1847, %s14, 1
      %s1849 = smul.addr %s1848, 8
      %s1850 = smul.addr %s1849, 8
      %s1851 = scalar_lea.vmem %s3, %s1850
      // Predicated region
      $region33: #{down_forward.1} parent=31 // pred_check
        %p1852 = pneg %p100
      $region34: #{down_forward.1} parent=31 // pred_check_branch
        %1854 = sbr.rel (%p1852) target = $region36
      $region35: #{down_forward.1} parent=31 // pred_region
        _
      $region36: #{down_forward.1} parent=31 // pred_fallthru
        _
    $region32: #{down_forward.1} parent=5 // pred_fallthru
      _
    %p1855 = scmp.le.s32.totalorder 2, %s9
    // Predicated region
    $region37: #{down_forward.1} parent=5 // pred_check
      %p1856 = pneg %p1855
    $region38: #{down_forward.1} parent=5 // pred_check_branch
      %1858 = sbr.rel (%p1856) target = $region40
    $region39: #{down_forward.1} parent=5 // pred_region
      %s1859 = ssub.s32 %s9, 2
      // Predicated region
      $region41: #{down_forward.1} parent=39 // pred_check
        %p1860 = pneg %p106
      $region42: #{down_forward.1} parent=39 // pred_check_branch
        %1862 = sbr.rel (%p1860) target = $region44
      $region43: #{down_forward.1} parent=39 // pred_region
        %p1863 = scmp.lt.s32.totalorder %s15, 1
        %s1864 = scalar_select %p1863, %s15, 1
        %s1865 = smul.addr %s1864, 8
        %s1866 = smul.addr %s1865, 8
        %s1867 = scalar_lea.vmem %s3, %s1866
      $region44: #{down_forward.1} parent=39 // pred_fallthru
        _
    $region40: #{down_forward.1} parent=5 // pred_fallthru
      _
  $region6: #{down_forward.1} parent=0 // loop_footer
    %s13 = sadd.s32 1, %s9
  $region7: #{down_forward.1} parent=0 // loop_footer_branch
    %8 = sbr.rel target = $region3
  $region8: #{down_forward.1} parent=0 // loop_exit
    _

</llo_original>
